<compile_context>
chip_gen: v7x
topology: tpu7x:2x2x1
jax: 0.10.0
libtpu: 0.0.40
codegen_flags: <defaults>
</compile_context>

<pallas_src>
import jax
import jax.numpy as jnp
from jax.experimental import pallas as pl
from jax.experimental.pallas import tpu as pltpu


def _round_up(a, b):
    return ((a + b - 1) // b) * b


def _vmem_capacity_bytes():
    try:
        return int(pltpu.get_tpu_info().vmem_capacity_bytes)
    except Exception:
        return 64 << 20  # conservative: v7x per-TensorCore capacity


def _pick_tn(n, per_sample_bytes, budget_bytes, target_bytes=4 << 20):
    """Samples per grid step.

    Grow the block (bigger DMAs, fewer ~0.35us grid-step overheads) while:
      - n stays divisible (no batch padding),
      - the double-buffered working set stays within the VMEM budget,
      - the grid keeps >= 2 steps so prefetch/writeback (and a second
        TensorCore on v7x) can overlap.
    We never shrink below 1 sample, so 1-TC chips (v5e/v6e) are never
    penalised just to manufacture grid steps.
    """
    tn = 1
    limit = min(target_bytes, budget_bytes)
    while True:
        nxt = tn * 2
        if nxt > n or n % nxt != 0:
            break
        if nxt * per_sample_bytes > limit:
            break
        if n // nxt < 2:
            break
        tn = nxt
    return tn


def xcnnlow_forward(x, conv_w, col_w, row_w, bias, padding=1, stride=1):
    """x: (N, C, H, W) float32. Returns (N, F, OH, OW) float32."""
    # TODO(synk): stride > 1 / groups > 1 would need a strided-slice variant
    # of the shifted-dot accumulation; module defaults (stride=1, groups=1)
    # are what is implemented here.
    assert stride == 1, "Pallas fused-conv path implements stride=1"

    N, C, H, W = x.shape
    F2, Cw, K, _ = conv_w.shape
    assert Cw == C
    Fo = F2 + col_w.shape[0]
    Hp, Wp = H + 2 * padding, W + 2 * padding
    OH, OW = Hp - K + 1, Wp - K + 1
    KK = K * K

    # ---- hoisted, loop-invariant low-rank weight composition (tiny) ----
    w1 = conv_w.reshape(F2, C * KK)                           # (F2, C*K*K)
    corr = (col_w @ (row_w @ w1)).reshape(Fo - F2, C, K, K)   # (Fo-F2, C, K, K)
    w_full = jnp.concatenate([conv_w, corr], axis=0)          # (Fo, C, K, K)
    # (K*K, Fo, C): per-tap weight slabs, indexed by kh*K+kw inside the kernel
    w_k = w_full.transpose(2, 3, 0, 1).reshape(KK, Fo, C)
    b2 = bias.reshape(Fo, 1)

    # ---- padded input, spatially flattened (lane-dense), NO im2col ----
    LIN = Hp * Wp                       # flattened padded plane length
    LOUT = OH * Wp                      # kernel output width (Wp-strided rows)
    LPAD = _round_up(LIN + K - 1, 128)  # room for the largest tap shift + lanes
    xp = jnp.pad(x, ((0, 0), (0, 0), (padding, padding), (padding, padding)))
    xf = jnp.pad(xp.reshape(N, C, LIN), ((0, 0), (0, 0), (0, LPAD - LIN)))

    # ---- VMEM-aware block sizing + explicit VMEM limit ----
    itemsize = 4  # f32
    per_sample_bytes = 2 * itemsize * (C * LPAD + Fo * LOUT)    # double-buffered
    resident_bytes = 2 * itemsize * (KK * Fo * C + Fo)          # weight + bias
    vmem_cap = _vmem_capacity_bytes()
    budget = max(vmem_cap - (16 << 20), 16 << 20)
    TN = _pick_tn(N, per_sample_bytes, budget - resident_bytes)
    working = TN * per_sample_bytes + resident_bytes + (1 << 20)
    assert working <= budget, (
        "per-step block too large; TODO(synk): row-chunked halo DMA")
    vmem_limit = int(min(max(working, 32 << 20), budget))

    def kernel(w_ref, b_ref, x_ref, o_ref):
        # w_ref: (K*K, Fo, C)   per-tap weights (resident)
        # b_ref: (Fo, 1)        bias (resident)
        # x_ref: (TN, C, LPAD)  flattened padded planes, lanes over spatial
        # o_ref: (TN, Fo, LOUT) Wp-strided output rows, lane-dense stores
        for t in range(TN):
            acc = jnp.zeros((Fo, LOUT), jnp.float32)
            for kh in range(K):
                for kw in range(K):
                    s = kh * Wp + kw
                    acc = acc + jnp.dot(
                        w_ref[kh * K + kw],
                        x_ref[t, :, s:s + LOUT],
                        preferred_element_type=jnp.float32,
                    )
            o_ref[t] = (acc + b_ref[...]).astype(o_ref.dtype)

    out_flat = pl.pallas_call(
        kernel,
        out_shape=jax.ShapeDtypeStruct((N, Fo, LOUT), jnp.float32),
        grid_spec=pltpu.PrefetchScalarGridSpec(
            num_scalar_prefetch=0,
            grid=(N // TN,),
            in_specs=[
                pl.BlockSpec((KK, Fo, C), lambda i: (0, 0, 0)),   # weights (resident)
                pl.BlockSpec((Fo, 1), lambda i: (0, 0)),          # bias (resident)
                pl.BlockSpec((TN, C, LPAD), lambda i: (i, 0, 0)),  # input planes
            ],
            out_specs=pl.BlockSpec((TN, Fo, LOUT), lambda i: (i, 0, 0)),
        ),
        compiler_params=pltpu.CompilerParams(
            dimension_semantics=("parallel",),
            vmem_limit_bytes=vmem_limit,
        ),
    )(w_k, b2, xf)

    # Final layout: metadata reshape + drop the (Wp-OW) padding columns.
    out = out_flat.reshape(N, Fo, OH, Wp)[:, :, :, :OW]
    return out


def reference_forward(x, conv_w, col_w, row_w, bias, padding=1, stride=1):
    F2, C, K, _ = conv_w.shape
    corr = (col_w @ (row_w @ conv_w.reshape(F2, -1))).reshape(-1, C, K, K)
    wfull = jnp.concatenate([conv_w, corr], axis=0)
    y = jax.lax.conv_general_dilated(
        x, wfull, window_strides=(stride, stride),
        padding=[(padding, padding), (padding, padding)],
        dimension_numbers=("NCHW", "OIHW", "NCHW"))
    return y + bias.reshape(1, -1, 1, 1)


if __name__ == "__main__":
    # module config: channels=4, filters=8, kernel_size=3, padding=1, stride=1,
    #                groups=1, rank=1, bias=True   (times = 2 -> F2 = 4, R = 4)
    channels, filters, K = 4, 8, 3
    times, rank = 2, 1
    F2 = filters // times
    R = int(F2 * rank)
    N, H, W = 2, 16, 16

    key = jax.random.PRNGKey(0)
    k0, k1, k2, k3, k4 = jax.random.split(key, 5)

    # xavier_uniform bound for the conv weight
    fan_in = channels * K * K
    fan_out = F2 * K * K
    xav = (6.0 / (fan_in + fan_out)) ** 0.5
    conv_w = jax.random.uniform(k0, (F2, channels, K, K), jnp.float32, -xav, xav)
    col_w = jax.random.uniform(k1, (filters - F2, R), jnp.float32, -0.1, 0.1)
    row_w = jax.random.uniform(k2, (R, F2), jnp.float32, -0.1, 0.1)
    bias = jax.random.uniform(k3, (filters,), jnp.float32, -0.1, 0.1)
    x = jax.random.normal(k4, (N, channels, H, W), jnp.float32)

    y = xcnnlow_forward(x, conv_w, col_w, row_w, bias, padding=1, stride=1)
    y = jax.block_until_ready(y)

    y_ref = reference_forward(x, conv_w, col_w, row_w, bias, padding=1, stride=1)
    assert y.shape == (N, filters, H, W)
    assert jnp.allclose(y, y_ref, atol=1e-4, rtol=1e-4)

    print("KERNEL_OK")
</pallas_src>

<mosaic_0001>
module attributes {stable_mosaic.version = 11 : i64} {
  func.func @kernel(%arg0: i32, %arg1: memref<9x8x4xf32, #tpu.memory_space<vmem>>, %arg2: memref<8x1xf32, #tpu.memory_space<vmem>>, %arg3: memref<1x4x384xf32, #tpu.memory_space<vmem>>, %arg4: memref<1x8x288xf32, #tpu.memory_space<vmem>>) attributes {dimension_semantics = [#tpu.dimension_semantics<parallel>], iteration_bounds = array<i64: 2>, scalar_prefetch = 0 : i64, scratch_operands = 0 : i64, tpu.core_type = #tpu.core_type<tc>, window_params = [{pipeline_mode = #tpu.pipeline_mode<synchronous>, transform_indices = @transform_0, window_bounds = array<i64: 9, 8, 4>}, {pipeline_mode = #tpu.pipeline_mode<synchronous>, transform_indices = @transform_1, window_bounds = array<i64: 8, 1>}, {transform_indices = @transform_2, window_bounds = array<i64: 1, 4, 384>}, {transform_indices = @transform_3, window_bounds = array<i64: 1, 8, 288>}]} {
    %cst = arith.constant 0.000000e+00 : f32
    %0 = vector.broadcast %cst : f32 to vector<8x288xf32>
    %c0 = arith.constant 0 : index
    %c0_0 = arith.constant 0 : index
    %c0_1 = arith.constant 0 : index
    %1 = vector.load %arg1[%c0, %c0_0, %c0_1] : memref<9x8x4xf32, #tpu.memory_space<vmem>>, vector<1x8x4xf32>
    %2 = vector.shape_cast %1 : vector<1x8x4xf32> to vector<8x4xf32>
    %c0_2 = arith.constant 0 : index
    %c0_3 = arith.constant 0 : index
    %c0_4 = arith.constant 0 : index
    %3 = vector.load %arg3[%c0_2, %c0_3, %c0_4] : memref<1x4x384xf32, #tpu.memory_space<vmem>>, vector<1x4x288xf32>
    %4 = vector.shape_cast %3 : vector<1x4x288xf32> to vector<4x288xf32>
    %cst_5 = arith.constant dense<0.000000e+00> : vector<8x288xf32>
    %5 = tpu.matmul %2, %4, %cst_5 {dimension_numbers = #tpu.dot_dimension_numbers<[1], [0], [0], [1], [0, 0, 1, 1], [], []>} : vector<8x4xf32>, vector<4x288xf32>, vector<8x288xf32> -> vector<8x288xf32>
    %6 = arith.addf %0, %5 : vector<8x288xf32>
    %c1 = arith.constant 1 : index
    %c0_6 = arith.constant 0 : index
    %c0_7 = arith.constant 0 : index
    %7 = vector.load %arg1[%c1, %c0_6, %c0_7] : memref<9x8x4xf32, #tpu.memory_space<vmem>>, vector<1x8x4xf32>
    %8 = vector.shape_cast %7 : vector<1x8x4xf32> to vector<8x4xf32>
    %c0_8 = arith.constant 0 : index
    %c0_9 = arith.constant 0 : index
    %c1_10 = arith.constant 1 : index
    %9 = vector.load %arg3[%c0_8, %c0_9, %c1_10] : memref<1x4x384xf32, #tpu.memory_space<vmem>>, vector<1x4x288xf32>
    %10 = vector.shape_cast %9 : vector<1x4x288xf32> to vector<4x288xf32>
    %cst_11 = arith.constant dense<0.000000e+00> : vector<8x288xf32>
    %11 = tpu.matmul %8, %10, %cst_11 {dimension_numbers = #tpu.dot_dimension_numbers<[1], [0], [0], [1], [0, 0, 1, 1], [], []>} : vector<8x4xf32>, vector<4x288xf32>, vector<8x288xf32> -> vector<8x288xf32>
    %12 = arith.addf %6, %11 : vector<8x288xf32>
    %c2 = arith.constant 2 : index
    %c0_12 = arith.constant 0 : index
    %c0_13 = arith.constant 0 : index
    %13 = vector.load %arg1[%c2, %c0_12, %c0_13] : memref<9x8x4xf32, #tpu.memory_space<vmem>>, vector<1x8x4xf32>
    %14 = vector.shape_cast %13 : vector<1x8x4xf32> to vector<8x4xf32>
    %c0_14 = arith.constant 0 : index
    %c0_15 = arith.constant 0 : index
    %c2_16 = arith.constant 2 : index
    %15 = vector.load %arg3[%c0_14, %c0_15, %c2_16] : memref<1x4x384xf32, #tpu.memory_space<vmem>>, vector<1x4x288xf32>
    %16 = vector.shape_cast %15 : vector<1x4x288xf32> to vector<4x288xf32>
    %cst_17 = arith.constant dense<0.000000e+00> : vector<8x288xf32>
    %17 = tpu.matmul %14, %16, %cst_17 {dimension_numbers = #tpu.dot_dimension_numbers<[1], [0], [0], [1], [0, 0, 1, 1], [], []>} : vector<8x4xf32>, vector<4x288xf32>, vector<8x288xf32> -> vector<8x288xf32>
    %18 = arith.addf %12, %17 : vector<8x288xf32>
    %c3 = arith.constant 3 : index
    %c0_18 = arith.constant 0 : index
    %c0_19 = arith.constant 0 : index
    %19 = vector.load %arg1[%c3, %c0_18, %c0_19] : memref<9x8x4xf32, #tpu.memory_space<vmem>>, vector<1x8x4xf32>
    %20 = vector.shape_cast %19 : vector<1x8x4xf32> to vector<8x4xf32>
    %c0_20 = arith.constant 0 : index
    %c0_21 = arith.constant 0 : index
    %c18 = arith.constant 18 : index
    %21 = vector.load %arg3[%c0_20, %c0_21, %c18] : memref<1x4x384xf32, #tpu.memory_space<vmem>>, vector<1x4x288xf32>
    %22 = vector.shape_cast %21 : vector<1x4x288xf32> to vector<4x288xf32>
    %cst_22 = arith.constant dense<0.000000e+00> : vector<8x288xf32>
    %23 = tpu.matmul %20, %22, %cst_22 {dimension_numbers = #tpu.dot_dimension_numbers<[1], [0], [0], [1], [0, 0, 1, 1], [], []>} : vector<8x4xf32>, vector<4x288xf32>, vector<8x288xf32> -> vector<8x288xf32>
    %24 = arith.addf %18, %23 : vector<8x288xf32>
    %c4 = arith.constant 4 : index
    %c0_23 = arith.constant 0 : index
    %c0_24 = arith.constant 0 : index
    %25 = vector.load %arg1[%c4, %c0_23, %c0_24] : memref<9x8x4xf32, #tpu.memory_space<vmem>>, vector<1x8x4xf32>
    %26 = vector.shape_cast %25 : vector<1x8x4xf32> to vector<8x4xf32>
    %c0_25 = arith.constant 0 : index
    %c0_26 = arith.constant 0 : index
    %c19 = arith.constant 19 : index
    %27 = vector.load %arg3[%c0_25, %c0_26, %c19] : memref<1x4x384xf32, #tpu.memory_space<vmem>>, vector<1x4x288xf32>
    %28 = vector.shape_cast %27 : vector<1x4x288xf32> to vector<4x288xf32>
    %cst_27 = arith.constant dense<0.000000e+00> : vector<8x288xf32>
    %29 = tpu.matmul %26, %28, %cst_27 {dimension_numbers = #tpu.dot_dimension_numbers<[1], [0], [0], [1], [0, 0, 1, 1], [], []>} : vector<8x4xf32>, vector<4x288xf32>, vector<8x288xf32> -> vector<8x288xf32>
    %30 = arith.addf %24, %29 : vector<8x288xf32>
    %c5 = arith.constant 5 : index
    %c0_28 = arith.constant 0 : index
    %c0_29 = arith.constant 0 : index
    %31 = vector.load %arg1[%c5, %c0_28, %c0_29] : memref<9x8x4xf32, #tpu.memory_space<vmem>>, vector<1x8x4xf32>
    %32 = vector.shape_cast %31 : vector<1x8x4xf32> to vector<8x4xf32>
    %c0_30 = arith.constant 0 : index
    %c0_31 = arith.constant 0 : index
    %c20 = arith.constant 20 : index
    %33 = vector.load %arg3[%c0_30, %c0_31, %c20] : memref<1x4x384xf32, #tpu.memory_space<vmem>>, vector<1x4x288xf32>
    %34 = vector.shape_cast %33 : vector<1x4x288xf32> to vector<4x288xf32>
    %cst_32 = arith.constant dense<0.000000e+00> : vector<8x288xf32>
    %35 = tpu.matmul %32, %34, %cst_32 {dimension_numbers = #tpu.dot_dimension_numbers<[1], [0], [0], [1], [0, 0, 1, 1], [], []>} : vector<8x4xf32>, vector<4x288xf32>, vector<8x288xf32> -> vector<8x288xf32>
    %36 = arith.addf %30, %35 : vector<8x288xf32>
    %c6 = arith.constant 6 : index
    %c0_33 = arith.constant 0 : index
    %c0_34 = arith.constant 0 : index
    %37 = vector.load %arg1[%c6, %c0_33, %c0_34] : memref<9x8x4xf32, #tpu.memory_space<vmem>>, vector<1x8x4xf32>
    %38 = vector.shape_cast %37 : vector<1x8x4xf32> to vector<8x4xf32>
    %c0_35 = arith.constant 0 : index
    %c0_36 = arith.constant 0 : index
    %c36 = arith.constant 36 : index
    %39 = vector.load %arg3[%c0_35, %c0_36, %c36] : memref<1x4x384xf32, #tpu.memory_space<vmem>>, vector<1x4x288xf32>
    %40 = vector.shape_cast %39 : vector<1x4x288xf32> to vector<4x288xf32>
    %cst_37 = arith.constant dense<0.000000e+00> : vector<8x288xf32>
    %41 = tpu.matmul %38, %40, %cst_37 {dimension_numbers = #tpu.dot_dimension_numbers<[1], [0], [0], [1], [0, 0, 1, 1], [], []>} : vector<8x4xf32>, vector<4x288xf32>, vector<8x288xf32> -> vector<8x288xf32>
    %42 = arith.addf %36, %41 : vector<8x288xf32>
    %c7 = arith.constant 7 : index
    %c0_38 = arith.constant 0 : index
    %c0_39 = arith.constant 0 : index
    %43 = vector.load %arg1[%c7, %c0_38, %c0_39] : memref<9x8x4xf32, #tpu.memory_space<vmem>>, vector<1x8x4xf32>
    %44 = vector.shape_cast %43 : vector<1x8x4xf32> to vector<8x4xf32>
    %c0_40 = arith.constant 0 : index
    %c0_41 = arith.constant 0 : index
    %c37 = arith.constant 37 : index
    %45 = vector.load %arg3[%c0_40, %c0_41, %c37] : memref<1x4x384xf32, #tpu.memory_space<vmem>>, vector<1x4x288xf32>
    %46 = vector.shape_cast %45 : vector<1x4x288xf32> to vector<4x288xf32>
    %cst_42 = arith.constant dense<0.000000e+00> : vector<8x288xf32>
    %47 = tpu.matmul %44, %46, %cst_42 {dimension_numbers = #tpu.dot_dimension_numbers<[1], [0], [0], [1], [0, 0, 1, 1], [], []>} : vector<8x4xf32>, vector<4x288xf32>, vector<8x288xf32> -> vector<8x288xf32>
    %48 = arith.addf %42, %47 : vector<8x288xf32>
    %c8 = arith.constant 8 : index
    %c0_43 = arith.constant 0 : index
    %c0_44 = arith.constant 0 : index
    %49 = vector.load %arg1[%c8, %c0_43, %c0_44] : memref<9x8x4xf32, #tpu.memory_space<vmem>>, vector<1x8x4xf32>
    %50 = vector.shape_cast %49 : vector<1x8x4xf32> to vector<8x4xf32>
    %c0_45 = arith.constant 0 : index
    %c0_46 = arith.constant 0 : index
    %c38 = arith.constant 38 : index
    %51 = vector.load %arg3[%c0_45, %c0_46, %c38] : memref<1x4x384xf32, #tpu.memory_space<vmem>>, vector<1x4x288xf32>
    %52 = vector.shape_cast %51 : vector<1x4x288xf32> to vector<4x288xf32>
    %cst_47 = arith.constant dense<0.000000e+00> : vector<8x288xf32>
    %53 = tpu.matmul %50, %52, %cst_47 {dimension_numbers = #tpu.dot_dimension_numbers<[1], [0], [0], [1], [0, 0, 1, 1], [], []>} : vector<8x4xf32>, vector<4x288xf32>, vector<8x288xf32> -> vector<8x288xf32>
    %54 = arith.addf %48, %53 : vector<8x288xf32>
    %c0_48 = arith.constant 0 : index
    %c0_49 = arith.constant 0 : index
    %55 = vector.load %arg2[%c0_48, %c0_49] : memref<8x1xf32, #tpu.memory_space<vmem>>, vector<8x1xf32>
    %56 = vector.broadcast %55 : vector<8x1xf32> to vector<8x288xf32>
    %57 = arith.addf %54, %56 : vector<8x288xf32>
    %c0_50 = arith.constant 0 : index
    %c0_51 = arith.constant 0 : index
    %c0_52 = arith.constant 0 : index
    %58 = vector.load %arg4[%c0_50, %c0_51, %c0_52] : memref<1x8x288xf32, #tpu.memory_space<vmem>>, vector<1x8x288xf32>
    %59 = vector.shape_cast %58 : vector<1x8x288xf32> to vector<8x288xf32>
    %60 = vector.shape_cast %57 : vector<8x288xf32> to vector<1x8x288xf32>
    tpu.vector_store %arg4[%c0_50, %c0_51, %c0_52], %60 {strides = array<i32>} : memref<1x8x288xf32, #tpu.memory_space<vmem>>, vector<1x8x288xf32>,
    return
  }
  func.func @transform_0(%arg0: i32) -> (i32, i32, i32) {
    %c0_i32 = arith.constant 0 : i32
    %c0_i32_0 = arith.constant 0 : i32
    %c0_i32_1 = arith.constant 0 : i32
    %c0_i32_2 = arith.constant 0 : i32
    return %c0_i32, %c0_i32_0, %c0_i32_1 : i32, i32, i32
  }
  func.func @transform_1(%arg0: i32) -> (i32, i32) {
    %c0_i32 = arith.constant 0 : i32
    %c0_i32_0 = arith.constant 0 : i32
    %c0_i32_1 = arith.constant 0 : i32
    return %c0_i32, %c0_i32_0 : i32, i32
  }
  func.func @transform_2(%arg0: i32) -> (i32, i32, i32) {
    %c0_i32 = arith.constant 0 : i32
    %c0_i32_0 = arith.constant 0 : i32
    %c0_i32_1 = arith.constant 0 : i32
    return %arg0, %c0_i32, %c0_i32_0 : i32, i32, i32
  }
  func.func @transform_3(%arg0: i32) -> (i32, i32, i32) {
    %c0_i32 = arith.constant 0 : i32
    %c0_i32_0 = arith.constant 0 : i32
    %c0_i32_1 = arith.constant 0 : i32
    return %arg0, %c0_i32, %c0_i32_0 : i32, i32, i32
  }
}

</mosaic_0001>

<llo_original>
// kernel: tpu_custom_call.1
$region0: #{tpu_custom_call.1}
  #allocation0 [shape = 'u32[]', space=smem, size = 0x4, offset = 0x4, fixed_abs, tag = 'smem constant byte address 0x4 - core index']
  #allocation1 [shape = 'u32[144,128]{1,0:T(1,128)}', space=vmem, size = 0x12000, scoped, tag = 'internal scratch']
  %s0 = inlined_call_operand.vmem [shape: f32[9,8,4], index: 0, kind: input, shape index: {}]
  %s1 = inlined_call_operand.vmem [shape: f32[8,1], index: 1, kind: input, shape index: {}]
  %s2 = inlined_call_operand.vmem [shape: f32[2,4,384], index: 2, kind: input, shape index: {}]
  %s3 = inlined_call_operand.hbm [shape: f32[2,8,288], index: 3, kind: output, shape index: {}]
  %s4 = sld [smem:[#allocation0]]
  $region45: #{tpu_custom_call.1} parent=0
    _
  %s6 = ssub.s32 1, %s4
  %s7 = scalar_select 0, %s6, %s4
  $region1: #{tpu_custom_call.1} parent=0
    #allocation2 [shape = 'u8[24576]{0}', space=vmem, size = 0x6000, scoped, tag = 'output window, operand 0']
    #allocation3 [shape = 's32[2]{0}', space=sflag, size = 0x8, scoped, tag = 'scoped memory for tpu_custom_call.1']
    %8 = vsyncpa [#allocation3], 0
    %s9 = scalar_lea.sflag [#allocation3], 1
    %10 = vsyncpa %s9, 0
    loop: start=0, step=1, limit=4
    $region2: #{tpu_custom_call.1} parent=1 // loop_pre_header
      _
    $region3: #{tpu_custom_call.1} parent=1 // loop_header
      %s12 = sphi 0, %s16
      %p13 = scmp.ge.s32.totalorder %s12, 4
      %s20 = sphi 0, %s20
      %s22 = sphi 0, %s20
      %s23 = sphi 0, %s22
      %s37 = sphi 0, %s23
      %s41 = sphi 0, %s41
      %s43 = sphi 0, %s41
      %s44 = sphi 0, %s43
      %s58 = sphi 0, %s44
      %s64 = sphi 0, %s66
      %s67 = sphi 0, %s64
      %s68 = sphi 0, %s67
      %s84 = sphi 0, %s68
      %s90 = sphi 0, %s92
      %s93 = sphi 0, %s90
      %s94 = sphi 0, %s93
      %s110 = sphi 0, %s94
    $region4: #{tpu_custom_call.1} parent=1 // loop_header_branch
      %15 = sbr.rel (%p13) target = $region8
    $region5: #{tpu_custom_call.1} parent=1 // loop_body
      %s17 = ssub.s32 %s12, 1
      %s18 = ssub.s32 %s12, 2
      %s19 = sadd.s32 %s12, 1
      %s21 = sadd.s32 %s20, 1
      %p24 = scmp.eq.s32.totalorder %s12, 1
      %p25 = scmp.ne.s32.totalorder %s20, %s22
      %p26 = scmp.eq.s32.totalorder %s12, 0
      %p27 = por %p25, %p26
      %p28 = scmp.ne.s32.totalorder %s20, %s22
      %p29 = scmp.eq.s32.totalorder %s17, 1
      %p30 = por %p28, %p29
      %p31 = scmp.ne.s32.totalorder %s22, %s23
      %p32 = scmp.eq.s32.totalorder %s17, 0
      %p33 = por %p31, %p32
      %p34 = scmp.ne.s32.totalorder %s22, %s23
      %p35 = scmp.eq.s32.totalorder %s18, 1
      %p36 = por %p34, %p35
      %p38 = scmp.ne.s32.totalorder %s23, %s37
      %p39 = scmp.eq.s32.totalorder %s18, 0
      %p40 = por %p38, %p39
      %s42 = sadd.s32 %s41, 1
      %p45 = scmp.eq.s32.totalorder %s12, 1
      %p46 = scmp.ne.s32.totalorder %s41, %s43
      %p47 = scmp.eq.s32.totalorder %s12, 0
      %p48 = por %p46, %p47
      %p49 = scmp.ne.s32.totalorder %s41, %s43
      %p50 = scmp.eq.s32.totalorder %s17, 1
      %p51 = por %p49, %p50
      %p52 = scmp.ne.s32.totalorder %s43, %s44
      %p53 = scmp.eq.s32.totalorder %s17, 0
      %p54 = por %p52, %p53
      %p55 = scmp.ne.s32.totalorder %s43, %s44
      %p56 = scmp.eq.s32.totalorder %s18, 1
      %p57 = por %p55, %p56
      %p59 = scmp.ne.s32.totalorder %s44, %s58
      %p60 = scmp.eq.s32.totalorder %s18, 0
      %p61 = por %p59, %p60
      %s62 = ssub.s32 %s12, %s19
      %p63 = scmp.eq.s32.totalorder %s62, 0
      %s65 = sadd.s32 %s64, 1
      %s66 = scalar_select %p63, %s64, %s65
      %p69 = pneg %p63
      %p70 = scmp.eq.s32.totalorder %s12, 1
      %p71 = por %p69, %p70
      %p72 = scmp.ne.s32.totalorder %s64, %s67
      %p73 = scmp.eq.s32.totalorder %s12, 0
      %p74 = por %p72, %p73
      %p75 = scmp.ne.s32.totalorder %s64, %s67
      %p76 = scmp.eq.s32.totalorder %s17, 1
      %p77 = por %p75, %p76
      %p78 = scmp.ne.s32.totalorder %s67, %s68
      %p79 = scmp.eq.s32.totalorder %s17, 0
      %p80 = por %p78, %p79
      %p81 = scmp.ne.s32.totalorder %s67, %s68
      %p82 = scmp.eq.s32.totalorder %s18, 1
      %p83 = por %p81, %p82
      %p85 = scmp.ne.s32.totalorder %s68, %s84
      %p86 = scmp.eq.s32.totalorder %s18, 0
      %p87 = por %p85, %p86
      %s88 = ssub.s32 %s12, %s19
      %p89 = scmp.eq.s32.totalorder %s88, 0
      %s91 = sadd.s32 %s90, 1
      %s92 = scalar_select %p89, %s90, %s91
      %p95 = pneg %p89
      %p96 = scmp.eq.s32.totalorder %s12, 1
      %p97 = por %p95, %p96
      %p98 = scmp.ne.s32.totalorder %s90, %s93
      %p99 = scmp.eq.s32.totalorder %s12, 0
      %p100 = por %p98, %p99
      %p101 = scmp.ne.s32.totalorder %s90, %s93
      %p102 = scmp.eq.s32.totalorder %s17, 1
      %p103 = por %p101, %p102
      %p104 = scmp.ne.s32.totalorder %s93, %s94
      %p105 = scmp.eq.s32.totalorder %s17, 0
      %p106 = por %p104, %p105
      %p107 = scmp.ne.s32.totalorder %s93, %s94
      %p108 = scmp.eq.s32.totalorder %s18, 1
      %p109 = por %p107, %p108
      %p111 = scmp.ne.s32.totalorder %s94, %s110
      %p112 = scmp.eq.s32.totalorder %s18, 0
      %p113 = por %p111, %p112
      %p114 = scmp.le.s32.totalorder 1, %s12
      %p115 = scmp.lt.s32.totalorder %s12, 3
      %p116 = pnand %p114, %p115
      %p117 = pneg %p116
      // Predicated region
      $region9: #{tpu_custom_call.1} parent=5 // pred_check
        _
      $region10: #{tpu_custom_call.1} parent=5 // pred_check_branch
        %119 = sbr.rel (%p116) target = $region12
      $region11: #{tpu_custom_call.1} parent=5 // pred_region
        %s120 = ssub.s32 %s12, 1
        // Predicated region
        $region13: #{tpu_custom_call.1} parent=11 // pred_check
          %p121 = pneg %p33
        $region14: #{tpu_custom_call.1} parent=11 // pred_check_branch
          %123 = sbr.rel (%p121) target = $region16
        $region15: #{tpu_custom_call.1} parent=11 // pred_region
          _
        $region16: #{tpu_custom_call.1} parent=11 // pred_fallthru
          _
        // Predicated region
        $region17: #{tpu_custom_call.1} parent=11 // pred_check
          %p124 = pneg %p54
        $region18: #{tpu_custom_call.1} parent=11 // pred_check_branch
          %126 = sbr.rel (%p124) target = $region20
        $region19: #{tpu_custom_call.1} parent=11 // pred_region
          _
        $region20: #{tpu_custom_call.1} parent=11 // pred_fallthru
          _
      $region12: #{tpu_custom_call.1} parent=5 // pred_fallthru
        _
      %p127 = scmp.lt.s32.totalorder %s12, 2
      // Predicated region
      $region21: #{tpu_custom_call.1} parent=5 // pred_check
        %p128 = pneg %p127
      $region22: #{tpu_custom_call.1} parent=5 // pred_check_branch
        %130 = sbr.rel (%p128) target = $region24
      $region23: #{tpu_custom_call.1} parent=5 // pred_region
        // Predicated region
        $region25: #{tpu_custom_call.1} parent=23 // pred_check
          %p131 = pneg %p74
        $region26: #{tpu_custom_call.1} parent=23 // pred_check_branch
          %133 = sbr.rel (%p131) target = $region28
        $region27: #{tpu_custom_call.1} parent=23 // pred_region
          %p134 = scmp.lt.s32.totalorder %s12, 1
          %s135 = scalar_select %p134, %s12, 1
          %s136 = smul.addr %s135, 3
          %s137 = smul.addr %s136, 4
          %s138 = scalar_lea.vmem %s2, %s137
        $region28: #{tpu_custom_call.1} parent=23 // pred_fallthru
          _
      $region24: #{tpu_custom_call.1} parent=5 // pred_fallthru
        _
      %p139 = scmp.le.s32.totalorder 1, %s12
      %p140 = scmp.lt.s32.totalorder %s12, 3
      %p141 = pnand %p139, %p140
      %p142 = pneg %p141
      // Predicated region
      $region29: #{tpu_custom_call.1} parent=5 // pred_check
        _
      $region30: #{tpu_custom_call.1} parent=5 // pred_check_branch
        %144 = sbr.rel (%p141) target = $region32
      $region31: #{tpu_custom_call.1} parent=5 // pred_region
        %s145 = ssub.s32 %s12, 1
        %p146 = pneg %p33
        %p147 = pneg %p30
        %p148 = pneg %p54
        %p149 = pneg %p51
        %p150 = scmp.lt.s32.totalorder %s17, 1
        %s151 = scalar_select %p150, %s17, 1
        %s152 = smul.addr %s151, 3
        %s153 = smul.addr %s152, 4
        %s154 = scalar_lea.vmem %s2, %s153
        %p155 = pneg %p80
        %p156 = pneg %p77
        %p157 = pneg %p106
        %p158 = pneg %p103
        %s159 = sand.u32 %s93, 1
        %s160 = scalar_lea.sflag [#allocation3], %s159
        %s161 = sand.u32 %s93, 1
        %s162 = smul.addr %s161, 24
        %s163 = scalar_lea.vmem [#allocation2], %s162
        %p164 = scmp.lt.s32.totalorder %s17, 1
        %s165 = scalar_select %p164, %s17, 1
        %s166 = smul.addr %s165, 3
        %s167 = smul.addr %s166, 4
        %s168 = scalar_lea.vmem %s2, %s167
        %v169 = vld [vmem:[%s0] sm:$0xff]
        %v170 = vld [vmem:[%s168] sm:$0xff]
        %v171 = vld [vmem:[%s168 + $0x8] sm:$0xf]
        %s172 = scalar_lea.vmem %s0, 8
        %v173 = vld [vmem:[%s172] sm:$0xff]
        %v176 = vcombine.high %v170, %v170
        %177 = vrot.lane.b32.xlu0 %v170, 127
        %v178 = vpop.permute.xlu0 %177
        %179 = vrot.lane.b32.xlu0 %v176, 127
        %v180 = vpop.permute.xlu0 %179
        %181 = vrot.lane.b32.xlu0 %v171, 127
        %v182 = vpop.permute.xlu0 %181
        %vm183 = vcmask 1039360
        %v184 = vsel %vm183, %v178, %v180
        %v185 = vsel %vm183, %v180, %v182
        %vm186 = vcmask 31744
        %v188 = vsel %vm186, %v173, 0
        %vm190 = vcmask 1043456
        %v191 = vsel %vm190, %v184, 0
        %v193 = vsel %vm190, %v185, 0
        %v195 = vsel %vm190, %v182, 0
        %197 = vmatprep.subr.mxu0 %v193
        %198 = vmatpush1.msra.mxu0 %v191
        %199 = vmatprep.subr.mxu0 0.0
        %200 = vmatpush1.msra.mxu0 0.0
        %201 = vmatprep.subr.mxu0 0.0
        %202 = vmatpush1.msra.mxu0 0.0
        %203 = vmatprep.subr.mxu0 0.0
        %204 = vmatpush1.msra.mxu0 0.0
        %205 = vmatprep.subr.mxu0 0.0
        %206 = vmatpush1.msra.mxu0 0.0
        %207 = vmatprep.subr.mxu0 0.0
        %208 = vmatpush1.msra.mxu0 0.0
        %209 = vmatprep.subr.mxu0 0.0
        %210 = vmatpush1.msra.mxu0 0.0
        %211 = vmatprep.subr.mxu0 0.0
        %212 = vmatpush1.msra.mxu0 0.0
        %213 = vmatprep.subr.mxu0 0.0
        %214 = vmatpush1.msra.mxu0 0.0
        %215 = vmatprep.subr.mxu0 0.0
        %216 = vmatpush1.msra.mxu0 0.0
        %217 = vmatprep.subr.mxu0 0.0
        %218 = vmatpush1.msra.mxu0 0.0
        %219 = vmatprep.subr.mxu0 0.0
        %220 = vmatpush1.msra.mxu0 0.0
        %221 = vmatprep.subr.mxu0 0.0
        %222 = vmatpush1.msra.mxu0 0.0
        %223 = vmatprep.subr.mxu0 0.0
        %224 = vmatpush1.msra.mxu0 0.0
        %225 = vmatprep.subr.mxu0 0.0
        %226 = vmatpush1.msra.mxu0 0.0
        %227 = vmatprep.subr.mxu0 0.0
        %228 = vmatpush1.msra.mxu0 0.0
        %229 = vmatprep.subr.mxu0 0.0
        %230 = vmatpush1.msra.mxu0 0.0
        %231 = vmatprep.subr.mxu0 0.0
        %232 = vmatpush1.msra.mxu0 0.0
        %233 = vmatprep.subr.mxu0 0.0
        %234 = vmatpush1.msra.mxu0 0.0
        %235 = vmatprep.subr.mxu0 0.0
        %236 = vmatpush1.msra.mxu0 0.0
        %237 = vmatprep.subr.mxu0 0.0
        %238 = vmatpush1.msra.mxu0 0.0
        %239 = vmatprep.subr.mxu0 0.0
        %240 = vmatpush1.msra.mxu0 0.0
        %241 = vmatprep.subr.mxu0 0.0
        %242 = vmatpush1.msra.mxu0 0.0
        %243 = vmatprep.subr.mxu0 0.0
        %244 = vmatpush1.msra.mxu0 0.0
        %245 = vmatprep.subr.mxu0 0.0
        %246 = vmatpush1.msra.mxu0 0.0
        %247 = vmatprep.subr.mxu0 0.0
        %248 = vmatpush1.msra.mxu0 0.0
        %249 = vmatprep.subr.mxu0 0.0
        %250 = vmatpush1.msra.mxu0 0.0
        %251 = vmatprep.subr.mxu0 0.0
        %252 = vmatpush1.msra.mxu0 0.0
        %253 = vmatprep.subr.mxu0 0.0
        %254 = vmatpush1.msra.mxu0 0.0
        %255 = vmatprep.subr.mxu0 0.0
        %256 = vmatpush1.msra.mxu0 0.0
        %257 = vmatprep.subr.mxu0 0.0
        %258 = vmatpush1.msra.mxu0 0.0
        %259 = vmatprep.subr.mxu0 0.0
        %260 = vmatpush1.msra.mxu0 0.0
        %261 = vmatprep.mubr.f32.mxu0 0.0
        %262 = vmatmul.mubr.f32.gmra.mrb[0].mxu0 %v188
        %v263 = vpop.f32.mrb[0].mxu0
        %v264 = vadd.f32 0.0, %v263
        %v265 = vpop.f32.mrb[0].mxu0
        %v266 = vadd.f32 0.0, %v265
        %267 = vdwg.mxu0
        %268 = vmatprep.subr.mxu0 0.0
        %269 = vmatpush1.msra.mxu0 %v195
        %270 = vmatprep.subr.mxu0 0.0
        %271 = vmatpush1.msra.mxu0 0.0
        %272 = vmatprep.subr.mxu0 0.0
        %273 = vmatpush1.msra.mxu0 0.0
        %274 = vmatprep.subr.mxu0 0.0
        %275 = vmatpush1.msra.mxu0 0.0
        %276 = vmatprep.subr.mxu0 0.0
        %277 = vmatpush1.msra.mxu0 0.0
        %278 = vmatprep.subr.mxu0 0.0
        %279 = vmatpush1.msra.mxu0 0.0
        %280 = vmatprep.subr.mxu0 0.0
        %281 = vmatpush1.msra.mxu0 0.0
        %282 = vmatprep.subr.mxu0 0.0
        %283 = vmatpush1.msra.mxu0 0.0
        %284 = vmatprep.subr.mxu0 0.0
        %285 = vmatpush1.msra.mxu0 0.0
        %286 = vmatprep.subr.mxu0 0.0
        %287 = vmatpush1.msra.mxu0 0.0
        %288 = vmatprep.subr.mxu0 0.0
        %289 = vmatpush1.msra.mxu0 0.0
        %290 = vmatprep.subr.mxu0 0.0
        %291 = vmatpush1.msra.mxu0 0.0
        %292 = vmatprep.subr.mxu0 0.0
        %293 = vmatpush1.msra.mxu0 0.0
        %294 = vmatprep.subr.mxu0 0.0
        %295 = vmatpush1.msra.mxu0 0.0
        %296 = vmatprep.subr.mxu0 0.0
        %297 = vmatpush1.msra.mxu0 0.0
        %298 = vmatprep.subr.mxu0 0.0
        %299 = vmatpush1.msra.mxu0 0.0
        %300 = vmatprep.subr.mxu0 0.0
        %301 = vmatpush1.msra.mxu0 0.0
        %302 = vmatprep.subr.mxu0 0.0
        %303 = vmatpush1.msra.mxu0 0.0
        %304 = vmatprep.subr.mxu0 0.0
        %305 = vmatpush1.msra.mxu0 0.0
        %306 = vmatprep.subr.mxu0 0.0
        %307 = vmatpush1.msra.mxu0 0.0
        %308 = vmatprep.subr.mxu0 0.0
        %309 = vmatpush1.msra.mxu0 0.0
        %310 = vmatprep.subr.mxu0 0.0
        %311 = vmatpush1.msra.mxu0 0.0
        %312 = vmatprep.subr.mxu0 0.0
        %313 = vmatpush1.msra.mxu0 0.0
        %314 = vmatprep.subr.mxu0 0.0
        %315 = vmatpush1.msra.mxu0 0.0
        %316 = vmatprep.subr.mxu0 0.0
        %317 = vmatpush1.msra.mxu0 0.0
        %318 = vmatprep.subr.mxu0 0.0
        %319 = vmatpush1.msra.mxu0 0.0
        %320 = vmatprep.subr.mxu0 0.0
        %321 = vmatpush1.msra.mxu0 0.0
        %322 = vmatprep.subr.mxu0 0.0
        %323 = vmatpush1.msra.mxu0 0.0
        %324 = vmatprep.subr.mxu0 0.0
        %325 = vmatpush1.msra.mxu0 0.0
        %326 = vmatprep.subr.mxu0 0.0
        %327 = vmatpush1.msra.mxu0 0.0
        %328 = vmatprep.subr.mxu0 0.0
        %329 = vmatpush1.msra.mxu0 0.0
        %330 = vmatprep.subr.mxu0 0.0
        %331 = vmatpush1.msra.mxu0 0.0
        %332 = vmatprep.mubr.f32.mxu0 0.0
        %333 = vmatmul.mubr.f32.gmra.mrb[0].mxu0 %v188
        %v334 = vpop.f32.mrb[0].mxu0
        %v335 = vadd.f32 0.0, %v334
        %v336 = vpop.f32.mrb[0].mxu0
        %337 = vdwg.mxu0
        %v339 = vsel %vm186, %v169, 0
        %v341 = vsel %vm190, %v170, 0
        %v343 = vsel %vm190, %v176, 0
        %v345 = vsel %vm190, %v171, 0
        %347 = vmatprep.subr.mxu0 %v343
        %348 = vmatpush1.msra.mxu0 %v341
        %349 = vmatprep.subr.mxu0 0.0
        %350 = vmatpush1.msra.mxu0 0.0
        %351 = vmatprep.subr.mxu0 0.0
        %352 = vmatpush1.msra.mxu0 0.0
        %353 = vmatprep.subr.mxu0 0.0
        %354 = vmatpush1.msra.mxu0 0.0
        %355 = vmatprep.subr.mxu0 0.0
        %356 = vmatpush1.msra.mxu0 0.0
        %357 = vmatprep.subr.mxu0 0.0
        %358 = vmatpush1.msra.mxu0 0.0
        %359 = vmatprep.subr.mxu0 0.0
        %360 = vmatpush1.msra.mxu0 0.0
        %361 = vmatprep.subr.mxu0 0.0
        %362 = vmatpush1.msra.mxu0 0.0
        %363 = vmatprep.subr.mxu0 0.0
        %364 = vmatpush1.msra.mxu0 0.0
        %365 = vmatprep.subr.mxu0 0.0
        %366 = vmatpush1.msra.mxu0 0.0
        %367 = vmatprep.subr.mxu0 0.0
        %368 = vmatpush1.msra.mxu0 0.0
        %369 = vmatprep.subr.mxu0 0.0
        %370 = vmatpush1.msra.mxu0 0.0
        %371 = vmatprep.subr.mxu0 0.0
        %372 = vmatpush1.msra.mxu0 0.0
        %373 = vmatprep.subr.mxu0 0.0
        %374 = vmatpush1.msra.mxu0 0.0
        %375 = vmatprep.subr.mxu0 0.0
        %376 = vmatpush1.msra.mxu0 0.0
        %377 = vmatprep.subr.mxu0 0.0
        %378 = vmatpush1.msra.mxu0 0.0
        %379 = vmatprep.subr.mxu0 0.0
        %380 = vmatpush1.msra.mxu0 0.0
        %381 = vmatprep.subr.mxu0 0.0
        %382 = vmatpush1.msra.mxu0 0.0
        %383 = vmatprep.subr.mxu0 0.0
        %384 = vmatpush1.msra.mxu0 0.0
        %385 = vmatprep.subr.mxu0 0.0
        %386 = vmatpush1.msra.mxu0 0.0
        %387 = vmatprep.subr.mxu0 0.0
        %388 = vmatpush1.msra.mxu0 0.0
        %389 = vmatprep.subr.mxu0 0.0
        %390 = vmatpush1.msra.mxu0 0.0
        %391 = vmatprep.subr.mxu0 0.0
        %392 = vmatpush1.msra.mxu0 0.0
        %393 = vmatprep.subr.mxu0 0.0
        %394 = vmatpush1.msra.mxu0 0.0
        %395 = vmatprep.subr.mxu0 0.0
        %396 = vmatpush1.msra.mxu0 0.0
        %397 = vmatprep.subr.mxu0 0.0
        %398 = vmatpush1.msra.mxu0 0.0
        %399 = vmatprep.subr.mxu0 0.0
        %400 = vmatpush1.msra.mxu0 0.0
        %401 = vmatprep.subr.mxu0 0.0
        %402 = vmatpush1.msra.mxu0 0.0
        %403 = vmatprep.subr.mxu0 0.0
        %404 = vmatpush1.msra.mxu0 0.0
        %405 = vmatprep.subr.mxu0 0.0
        %406 = vmatpush1.msra.mxu0 0.0
        %407 = vmatprep.subr.mxu0 0.0
        %408 = vmatpush1.msra.mxu0 0.0
        %409 = vmatprep.subr.mxu0 0.0
        %410 = vmatpush1.msra.mxu0 0.0
        %411 = vmatprep.mubr.f32.mxu0 0.0
        %412 = vmatmul.mubr.f32.gmra.mrb[0].mxu0 %v339
        %v413 = vpop.f32.mrb[0].mxu0
        %v414 = vadd.f32 %v264, %v413
        %v415 = vpop.f32.mrb[0].mxu0
        %v416 = vadd.f32 %v266, %v415
        %417 = vdwg.mxu0
        %418 = vmatprep.subr.mxu0 0.0
        %419 = vmatpush1.msra.mxu0 %v345
        %420 = vmatprep.subr.mxu0 0.0
        %421 = vmatpush1.msra.mxu0 0.0
        %422 = vmatprep.subr.mxu0 0.0
        %423 = vmatpush1.msra.mxu0 0.0
        %424 = vmatprep.subr.mxu0 0.0
        %425 = vmatpush1.msra.mxu0 0.0
        %426 = vmatprep.subr.mxu0 0.0
        %427 = vmatpush1.msra.mxu0 0.0
        %428 = vmatprep.subr.mxu0 0.0
        %429 = vmatpush1.msra.mxu0 0.0
        %430 = vmatprep.subr.mxu0 0.0
        %431 = vmatpush1.msra.mxu0 0.0
        %432 = vmatprep.subr.mxu0 0.0
        %433 = vmatpush1.msra.mxu0 0.0
        %434 = vmatprep.subr.mxu0 0.0
        %435 = vmatpush1.msra.mxu0 0.0
        %436 = vmatprep.subr.mxu0 0.0
        %437 = vmatpush1.msra.mxu0 0.0
        %438 = vmatprep.subr.mxu0 0.0
        %439 = vmatpush1.msra.mxu0 0.0
        %440 = vmatprep.subr.mxu0 0.0
        %441 = vmatpush1.msra.mxu0 0.0
        %442 = vmatprep.subr.mxu0 0.0
        %443 = vmatpush1.msra.mxu0 0.0
        %444 = vmatprep.subr.mxu0 0.0
        %445 = vmatpush1.msra.mxu0 0.0
        %446 = vmatprep.subr.mxu0 0.0
        %447 = vmatpush1.msra.mxu0 0.0
        %448 = vmatprep.subr.mxu0 0.0
        %449 = vmatpush1.msra.mxu0 0.0
        %450 = vmatprep.subr.mxu0 0.0
        %451 = vmatpush1.msra.mxu0 0.0
        %452 = vmatprep.subr.mxu0 0.0
        %453 = vmatpush1.msra.mxu0 0.0
        %454 = vmatprep.subr.mxu0 0.0
        %455 = vmatpush1.msra.mxu0 0.0
        %456 = vmatprep.subr.mxu0 0.0
        %457 = vmatpush1.msra.mxu0 0.0
        %458 = vmatprep.subr.mxu0 0.0
        %459 = vmatpush1.msra.mxu0 0.0
        %460 = vmatprep.subr.mxu0 0.0
        %461 = vmatpush1.msra.mxu0 0.0
        %462 = vmatprep.subr.mxu0 0.0
        %463 = vmatpush1.msra.mxu0 0.0
        %464 = vmatprep.subr.mxu0 0.0
        %465 = vmatpush1.msra.mxu0 0.0
        %466 = vmatprep.subr.mxu0 0.0
        %467 = vmatpush1.msra.mxu0 0.0
        %468 = vmatprep.subr.mxu0 0.0
        %469 = vmatpush1.msra.mxu0 0.0
        %470 = vmatprep.subr.mxu0 0.0
        %471 = vmatpush1.msra.mxu0 0.0
        %472 = vmatprep.subr.mxu0 0.0
        %473 = vmatpush1.msra.mxu0 0.0
        %474 = vmatprep.subr.mxu0 0.0
        %475 = vmatpush1.msra.mxu0 0.0
        %476 = vmatprep.subr.mxu0 0.0
        %477 = vmatpush1.msra.mxu0 0.0
        %478 = vmatprep.subr.mxu0 0.0
        %479 = vmatpush1.msra.mxu0 0.0
        %480 = vmatprep.subr.mxu0 0.0
        %481 = vmatpush1.msra.mxu0 0.0
        %482 = vmatprep.mubr.f32.mxu0 0.0
        %483 = vmatmul.mubr.f32.gmra.mrb[0].mxu0 %v339
        %v484 = vpop.f32.mrb[0].mxu0
        %v485 = vadd.f32 %v335, %v484
        %v486 = vpop.f32.mrb[0].mxu0
        %487 = vdwg.mxu0
        %s488 = scalar_lea.vmem %s0, 16
        %v489 = vld [vmem:[%s488] sm:$0xff]
        %v490 = vld [vmem:[%s168] sm:$0xff]
        %v491 = vld [vmem:[%s168 + $0x8] sm:$0xf]
        %v494 = vcombine.high %v490, %v490
        %495 = vrot.lane.b32.xlu0 %v490, 126
        %v496 = vpop.permute.xlu0 %495
        %497 = vrot.lane.b32.xlu0 %v494, 126
        %v498 = vpop.permute.xlu0 %497
        %499 = vrot.lane.b32.xlu0 %v491, 126
        %v500 = vpop.permute.xlu0 %499
        %vm501 = vcmask 1031168
        %v502 = vsel %vm501, %v496, %v498
        %v503 = vsel %vm501, %v498, %v500
        %v505 = vsel %vm186, %v489, 0
        %v507 = vsel %vm190, %v502, 0
        %v509 = vsel %vm190, %v503, 0
        %v511 = vsel %vm190, %v500, 0
        %513 = vmatprep.subr.mxu0 %v509
        %514 = vmatpush1.msra.mxu0 %v507
        %515 = vmatprep.subr.mxu0 0.0
        %516 = vmatpush1.msra.mxu0 0.0
        %517 = vmatprep.subr.mxu0 0.0
        %518 = vmatpush1.msra.mxu0 0.0
        %519 = vmatprep.subr.mxu0 0.0
        %520 = vmatpush1.msra.mxu0 0.0
        %521 = vmatprep.subr.mxu0 0.0
        %522 = vmatpush1.msra.mxu0 0.0
        %523 = vmatprep.subr.mxu0 0.0
        %524 = vmatpush1.msra.mxu0 0.0
        %525 = vmatprep.subr.mxu0 0.0
        %526 = vmatpush1.msra.mxu0 0.0
        %527 = vmatprep.subr.mxu0 0.0
        %528 = vmatpush1.msra.mxu0 0.0
        %529 = vmatprep.subr.mxu0 0.0
        %530 = vmatpush1.msra.mxu0 0.0
        %531 = vmatprep.subr.mxu0 0.0
        %532 = vmatpush1.msra.mxu0 0.0
        %533 = vmatprep.subr.mxu0 0.0
        %534 = vmatpush1.msra.mxu0 0.0
        %535 = vmatprep.subr.mxu0 0.0
        %536 = vmatpush1.msra.mxu0 0.0
        %537 = vmatprep.subr.mxu0 0.0
        %538 = vmatpush1.msra.mxu0 0.0
        %539 = vmatprep.subr.mxu0 0.0
        %540 = vmatpush1.msra.mxu0 0.0
        %541 = vmatprep.subr.mxu0 0.0
        %542 = vmatpush1.msra.mxu0 0.0
        %543 = vmatprep.subr.mxu0 0.0
        %544 = vmatpush1.msra.mxu0 0.0
        %545 = vmatprep.subr.mxu0 0.0
        %546 = vmatpush1.msra.mxu0 0.0
        %547 = vmatprep.subr.mxu0 0.0
        %548 = vmatpush1.msra.mxu0 0.0
        %549 = vmatprep.subr.mxu0 0.0
        %550 = vmatpush1.msra.mxu0 0.0
        %551 = vmatprep.subr.mxu0 0.0
        %552 = vmatpush1.msra.mxu0 0.0
        %553 = vmatprep.subr.mxu0 0.0
        %554 = vmatpush1.msra.mxu0 0.0
        %555 = vmatprep.subr.mxu0 0.0
        %556 = vmatpush1.msra.mxu0 0.0
        %557 = vmatprep.subr.mxu0 0.0
        %558 = vmatpush1.msra.mxu0 0.0
        %559 = vmatprep.subr.mxu0 0.0
        %560 = vmatpush1.msra.mxu0 0.0
        %561 = vmatprep.subr.mxu0 0.0
        %562 = vmatpush1.msra.mxu0 0.0
        %563 = vmatprep.subr.mxu0 0.0
        %564 = vmatpush1.msra.mxu0 0.0
        %565 = vmatprep.subr.mxu0 0.0
        %566 = vmatpush1.msra.mxu0 0.0
        %567 = vmatprep.subr.mxu0 0.0
        %568 = vmatpush1.msra.mxu0 0.0
        %569 = vmatprep.subr.mxu0 0.0
        %570 = vmatpush1.msra.mxu0 0.0
        %571 = vmatprep.subr.mxu0 0.0
        %572 = vmatpush1.msra.mxu0 0.0
        %573 = vmatprep.subr.mxu0 0.0
        %574 = vmatpush1.msra.mxu0 0.0
        %575 = vmatprep.subr.mxu0 0.0
        %576 = vmatpush1.msra.mxu0 0.0
        %577 = vmatprep.mubr.f32.mxu0 0.0
        %578 = vmatmul.mubr.f32.gmra.mrb[0].mxu0 %v505
        %v579 = vpop.f32.mrb[0].mxu0
        %v580 = vadd.f32 0.0, %v579
        %v581 = vpop.f32.mrb[0].mxu0
        %v582 = vadd.f32 0.0, %v581
        %583 = vdwg.mxu0
        %584 = vmatprep.subr.mxu0 0.0
        %585 = vmatpush1.msra.mxu0 %v511
        %586 = vmatprep.subr.mxu0 0.0
        %587 = vmatpush1.msra.mxu0 0.0
        %588 = vmatprep.subr.mxu0 0.0
        %589 = vmatpush1.msra.mxu0 0.0
        %590 = vmatprep.subr.mxu0 0.0
        %591 = vmatpush1.msra.mxu0 0.0
        %592 = vmatprep.subr.mxu0 0.0
        %593 = vmatpush1.msra.mxu0 0.0
        %594 = vmatprep.subr.mxu0 0.0
        %595 = vmatpush1.msra.mxu0 0.0
        %596 = vmatprep.subr.mxu0 0.0
        %597 = vmatpush1.msra.mxu0 0.0
        %598 = vmatprep.subr.mxu0 0.0
        %599 = vmatpush1.msra.mxu0 0.0
        %600 = vmatprep.subr.mxu0 0.0
        %601 = vmatpush1.msra.mxu0 0.0
        %602 = vmatprep.subr.mxu0 0.0
        %603 = vmatpush1.msra.mxu0 0.0
        %604 = vmatprep.subr.mxu0 0.0
        %605 = vmatpush1.msra.mxu0 0.0
        %606 = vmatprep.subr.mxu0 0.0
        %607 = vmatpush1.msra.mxu0 0.0
        %608 = vmatprep.subr.mxu0 0.0
        %609 = vmatpush1.msra.mxu0 0.0
        %610 = vmatprep.subr.mxu0 0.0
        %611 = vmatpush1.msra.mxu0 0.0
        %612 = vmatprep.subr.mxu0 0.0
        %613 = vmatpush1.msra.mxu0 0.0
        %614 = vmatprep.subr.mxu0 0.0
        %615 = vmatpush1.msra.mxu0 0.0
        %616 = vmatprep.subr.mxu0 0.0
        %617 = vmatpush1.msra.mxu0 0.0
        %618 = vmatprep.subr.mxu0 0.0
        %619 = vmatpush1.msra.mxu0 0.0
        %620 = vmatprep.subr.mxu0 0.0
        %621 = vmatpush1.msra.mxu0 0.0
        %622 = vmatprep.subr.mxu0 0.0
        %623 = vmatpush1.msra.mxu0 0.0
        %624 = vmatprep.subr.mxu0 0.0
        %625 = vmatpush1.msra.mxu0 0.0
        %626 = vmatprep.subr.mxu0 0.0
        %627 = vmatpush1.msra.mxu0 0.0
        %628 = vmatprep.subr.mxu0 0.0
        %629 = vmatpush1.msra.mxu0 0.0
        %630 = vmatprep.subr.mxu0 0.0
        %631 = vmatpush1.msra.mxu0 0.0
        %632 = vmatprep.subr.mxu0 0.0
        %633 = vmatpush1.msra.mxu0 0.0
        %634 = vmatprep.subr.mxu0 0.0
        %635 = vmatpush1.msra.mxu0 0.0
        %636 = vmatprep.subr.mxu0 0.0
        %637 = vmatpush1.msra.mxu0 0.0
        %638 = vmatprep.subr.mxu0 0.0
        %639 = vmatpush1.msra.mxu0 0.0
        %640 = vmatprep.subr.mxu0 0.0
        %641 = vmatpush1.msra.mxu0 0.0
        %642 = vmatprep.subr.mxu0 0.0
        %643 = vmatpush1.msra.mxu0 0.0
        %644 = vmatprep.subr.mxu0 0.0
        %645 = vmatpush1.msra.mxu0 0.0
        %646 = vmatprep.subr.mxu0 0.0
        %647 = vmatpush1.msra.mxu0 0.0
        %648 = vmatprep.mubr.f32.mxu0 0.0
        %649 = vmatmul.mubr.f32.gmra.mrb[0].mxu0 %v505
        %v650 = vpop.f32.mrb[0].mxu0
        %v651 = vadd.f32 0.0, %v650
        %v652 = vpop.f32.mrb[0].mxu0
        %653 = vdwg.mxu0
        %v654 = vadd.f32 %v414, %v580
        %v655 = vadd.f32 %v416, %v582
        %v656 = vadd.f32 %v485, %v651
        %s657 = scalar_lea.vmem %s0, 24
        %v658 = vld [vmem:[%s657] sm:$0xff]
        %v659 = vld [vmem:[%s168] sm:$0xff]
        %v660 = vld [vmem:[%s168 + $0x8] sm:$0xf]
        %v663 = vcombine.high %v659, %v659
        %664 = vrot.lane.b32.xlu0 %v659, 110
        %v665 = vpop.permute.xlu0 %664
        %666 = vrot.lane.b32.xlu0 %v663, 110
        %v667 = vpop.permute.xlu0 %666
        %668 = vrot.lane.b32.xlu0 %v660, 110
        %v669 = vpop.permute.xlu0 %668
        %vm670 = vcmask 900096
        %v671 = vsel %vm670, %v665, %v667
        %v672 = vsel %vm670, %v667, %v669
        %v674 = vsel %vm186, %v658, 0
        %v676 = vsel %vm190, %v671, 0
        %v678 = vsel %vm190, %v672, 0
        %v680 = vsel %vm190, %v669, 0
        %682 = vmatprep.subr.mxu0 %v678
        %683 = vmatpush1.msra.mxu0 %v676
        %684 = vmatprep.subr.mxu0 0.0
        %685 = vmatpush1.msra.mxu0 0.0
        %686 = vmatprep.subr.mxu0 0.0
        %687 = vmatpush1.msra.mxu0 0.0
        %688 = vmatprep.subr.mxu0 0.0
        %689 = vmatpush1.msra.mxu0 0.0
        %690 = vmatprep.subr.mxu0 0.0
        %691 = vmatpush1.msra.mxu0 0.0
        %692 = vmatprep.subr.mxu0 0.0
        %693 = vmatpush1.msra.mxu0 0.0
        %694 = vmatprep.subr.mxu0 0.0
        %695 = vmatpush1.msra.mxu0 0.0
        %696 = vmatprep.subr.mxu0 0.0
        %697 = vmatpush1.msra.mxu0 0.0
        %698 = vmatprep.subr.mxu0 0.0
        %699 = vmatpush1.msra.mxu0 0.0
        %700 = vmatprep.subr.mxu0 0.0
        %701 = vmatpush1.msra.mxu0 0.0
        %702 = vmatprep.subr.mxu0 0.0
        %703 = vmatpush1.msra.mxu0 0.0
        %704 = vmatprep.subr.mxu0 0.0
        %705 = vmatpush1.msra.mxu0 0.0
        %706 = vmatprep.subr.mxu0 0.0
        %707 = vmatpush1.msra.mxu0 0.0
        %708 = vmatprep.subr.mxu0 0.0
        %709 = vmatpush1.msra.mxu0 0.0
        %710 = vmatprep.subr.mxu0 0.0
        %711 = vmatpush1.msra.mxu0 0.0
        %712 = vmatprep.subr.mxu0 0.0
        %713 = vmatpush1.msra.mxu0 0.0
        %714 = vmatprep.subr.mxu0 0.0
        %715 = vmatpush1.msra.mxu0 0.0
        %716 = vmatprep.subr.mxu0 0.0
        %717 = vmatpush1.msra.mxu0 0.0
        %718 = vmatprep.subr.mxu0 0.0
        %719 = vmatpush1.msra.mxu0 0.0
        %720 = vmatprep.subr.mxu0 0.0
        %721 = vmatpush1.msra.mxu0 0.0
        %722 = vmatprep.subr.mxu0 0.0
        %723 = vmatpush1.msra.mxu0 0.0
        %724 = vmatprep.subr.mxu0 0.0
        %725 = vmatpush1.msra.mxu0 0.0
        %726 = vmatprep.subr.mxu0 0.0
        %727 = vmatpush1.msra.mxu0 0.0
        %728 = vmatprep.subr.mxu0 0.0
        %729 = vmatpush1.msra.mxu0 0.0
        %730 = vmatprep.subr.mxu0 0.0
        %731 = vmatpush1.msra.mxu0 0.0
        %732 = vmatprep.subr.mxu0 0.0
        %733 = vmatpush1.msra.mxu0 0.0
        %734 = vmatprep.subr.mxu0 0.0
        %735 = vmatpush1.msra.mxu0 0.0
        %736 = vmatprep.subr.mxu0 0.0
        %737 = vmatpush1.msra.mxu0 0.0
        %738 = vmatprep.subr.mxu0 0.0
        %739 = vmatpush1.msra.mxu0 0.0
        %740 = vmatprep.subr.mxu0 0.0
        %741 = vmatpush1.msra.mxu0 0.0
        %742 = vmatprep.subr.mxu0 0.0
        %743 = vmatpush1.msra.mxu0 0.0
        %744 = vmatprep.subr.mxu0 0.0
        %745 = vmatpush1.msra.mxu0 0.0
        %746 = vmatprep.mubr.f32.mxu0 0.0
        %747 = vmatmul.mubr.f32.gmra.mrb[0].mxu0 %v674
        %v748 = vpop.f32.mrb[0].mxu0
        %v749 = vadd.f32 0.0, %v748
        %v750 = vpop.f32.mrb[0].mxu0
        %v751 = vadd.f32 0.0, %v750
        %752 = vdwg.mxu0
        %753 = vmatprep.subr.mxu0 0.0
        %754 = vmatpush1.msra.mxu0 %v680
        %755 = vmatprep.subr.mxu0 0.0
        %756 = vmatpush1.msra.mxu0 0.0
        %757 = vmatprep.subr.mxu0 0.0
        %758 = vmatpush1.msra.mxu0 0.0
        %759 = vmatprep.subr.mxu0 0.0
        %760 = vmatpush1.msra.mxu0 0.0
        %761 = vmatprep.subr.mxu0 0.0
        %762 = vmatpush1.msra.mxu0 0.0
        %763 = vmatprep.subr.mxu0 0.0
        %764 = vmatpush1.msra.mxu0 0.0
        %765 = vmatprep.subr.mxu0 0.0
        %766 = vmatpush1.msra.mxu0 0.0
        %767 = vmatprep.subr.mxu0 0.0
        %768 = vmatpush1.msra.mxu0 0.0
        %769 = vmatprep.subr.mxu0 0.0
        %770 = vmatpush1.msra.mxu0 0.0
        %771 = vmatprep.subr.mxu0 0.0
        %772 = vmatpush1.msra.mxu0 0.0
        %773 = vmatprep.subr.mxu0 0.0
        %774 = vmatpush1.msra.mxu0 0.0
        %775 = vmatprep.subr.mxu0 0.0
        %776 = vmatpush1.msra.mxu0 0.0
        %777 = vmatprep.subr.mxu0 0.0
        %778 = vmatpush1.msra.mxu0 0.0
        %779 = vmatprep.subr.mxu0 0.0
        %780 = vmatpush1.msra.mxu0 0.0
        %781 = vmatprep.subr.mxu0 0.0
        %782 = vmatpush1.msra.mxu0 0.0
        %783 = vmatprep.subr.mxu0 0.0
        %784 = vmatpush1.msra.mxu0 0.0
        %785 = vmatprep.subr.mxu0 0.0
        %786 = vmatpush1.msra.mxu0 0.0
        %787 = vmatprep.subr.mxu0 0.0
        %788 = vmatpush1.msra.mxu0 0.0
        %789 = vmatprep.subr.mxu0 0.0
        %790 = vmatpush1.msra.mxu0 0.0
        %791 = vmatprep.subr.mxu0 0.0
        %792 = vmatpush1.msra.mxu0 0.0
        %793 = vmatprep.subr.mxu0 0.0
        %794 = vmatpush1.msra.mxu0 0.0
        %795 = vmatprep.subr.mxu0 0.0
        %796 = vmatpush1.msra.mxu0 0.0
        %797 = vmatprep.subr.mxu0 0.0
        %798 = vmatpush1.msra.mxu0 0.0
        %799 = vmatprep.subr.mxu0 0.0
        %800 = vmatpush1.msra.mxu0 0.0
        %801 = vmatprep.subr.mxu0 0.0
        %802 = vmatpush1.msra.mxu0 0.0
        %803 = vmatprep.subr.mxu0 0.0
        %804 = vmatpush1.msra.mxu0 0.0
        %805 = vmatprep.subr.mxu0 0.0
        %806 = vmatpush1.msra.mxu0 0.0
        %807 = vmatprep.subr.mxu0 0.0
        %808 = vmatpush1.msra.mxu0 0.0
        %809 = vmatprep.subr.mxu0 0.0
        %810 = vmatpush1.msra.mxu0 0.0
        %811 = vmatprep.subr.mxu0 0.0
        %812 = vmatpush1.msra.mxu0 0.0
        %813 = vmatprep.subr.mxu0 0.0
        %814 = vmatpush1.msra.mxu0 0.0
        %815 = vmatprep.subr.mxu0 0.0
        %816 = vmatpush1.msra.mxu0 0.0
        %817 = vmatprep.mubr.f32.mxu0 0.0
        %818 = vmatmul.mubr.f32.gmra.mrb[0].mxu0 %v674
        %v819 = vpop.f32.mrb[0].mxu0
        %v820 = vadd.f32 0.0, %v819
        %v821 = vpop.f32.mrb[0].mxu0
        %822 = vdwg.mxu0
        %v823 = vadd.f32 %v654, %v749
        %v824 = vadd.f32 %v655, %v751
        %v825 = vadd.f32 %v656, %v820
        %s826 = scalar_lea.vmem %s0, 32
        %v827 = vld [vmem:[%s826] sm:$0xff]
        %v828 = vld [vmem:[%s168] sm:$0xff]
        %v829 = vld [vmem:[%s168 + $0x8] sm:$0xf]
        %v832 = vcombine.high %v828, %v828
        %833 = vrot.lane.b32.xlu0 %v828, 109
        %v834 = vpop.permute.xlu0 %833
        %835 = vrot.lane.b32.xlu0 %v832, 109
        %v836 = vpop.permute.xlu0 %835
        %837 = vrot.lane.b32.xlu0 %v829, 109
        %v838 = vpop.permute.xlu0 %837
        %vm839 = vcmask 891904
        %v840 = vsel %vm839, %v834, %v836
        %v841 = vsel %vm839, %v836, %v838
        %v843 = vsel %vm186, %v827, 0
        %v845 = vsel %vm190, %v840, 0
        %v847 = vsel %vm190, %v841, 0
        %v849 = vsel %vm190, %v838, 0
        %851 = vmatprep.subr.mxu0 %v847
        %852 = vmatpush1.msra.mxu0 %v845
        %853 = vmatprep.subr.mxu0 0.0
        %854 = vmatpush1.msra.mxu0 0.0
        %855 = vmatprep.subr.mxu0 0.0
        %856 = vmatpush1.msra.mxu0 0.0
        %857 = vmatprep.subr.mxu0 0.0
        %858 = vmatpush1.msra.mxu0 0.0
        %859 = vmatprep.subr.mxu0 0.0
        %860 = vmatpush1.msra.mxu0 0.0
        %861 = vmatprep.subr.mxu0 0.0
        %862 = vmatpush1.msra.mxu0 0.0
        %863 = vmatprep.subr.mxu0 0.0
        %864 = vmatpush1.msra.mxu0 0.0
        %865 = vmatprep.subr.mxu0 0.0
        %866 = vmatpush1.msra.mxu0 0.0
        %867 = vmatprep.subr.mxu0 0.0
        %868 = vmatpush1.msra.mxu0 0.0
        %869 = vmatprep.subr.mxu0 0.0
        %870 = vmatpush1.msra.mxu0 0.0
        %871 = vmatprep.subr.mxu0 0.0
        %872 = vmatpush1.msra.mxu0 0.0
        %873 = vmatprep.subr.mxu0 0.0
        %874 = vmatpush1.msra.mxu0 0.0
        %875 = vmatprep.subr.mxu0 0.0
        %876 = vmatpush1.msra.mxu0 0.0
        %877 = vmatprep.subr.mxu0 0.0
        %878 = vmatpush1.msra.mxu0 0.0
        %879 = vmatprep.subr.mxu0 0.0
        %880 = vmatpush1.msra.mxu0 0.0
        %881 = vmatprep.subr.mxu0 0.0
        %882 = vmatpush1.msra.mxu0 0.0
        %883 = vmatprep.subr.mxu0 0.0
        %884 = vmatpush1.msra.mxu0 0.0
        %885 = vmatprep.subr.mxu0 0.0
        %886 = vmatpush1.msra.mxu0 0.0
        %887 = vmatprep.subr.mxu0 0.0
        %888 = vmatpush1.msra.mxu0 0.0
        %889 = vmatprep.subr.mxu0 0.0
        %890 = vmatpush1.msra.mxu0 0.0
        %891 = vmatprep.subr.mxu0 0.0
        %892 = vmatpush1.msra.mxu0 0.0
        %893 = vmatprep.subr.mxu0 0.0
        %894 = vmatpush1.msra.mxu0 0.0
        %895 = vmatprep.subr.mxu0 0.0
        %896 = vmatpush1.msra.mxu0 0.0
        %897 = vmatprep.subr.mxu0 0.0
        %898 = vmatpush1.msra.mxu0 0.0
        %899 = vmatprep.subr.mxu0 0.0
        %900 = vmatpush1.msra.mxu0 0.0
        %901 = vmatprep.subr.mxu0 0.0
        %902 = vmatpush1.msra.mxu0 0.0
        %903 = vmatprep.subr.mxu0 0.0
        %904 = vmatpush1.msra.mxu0 0.0
        %905 = vmatprep.subr.mxu0 0.0
        %906 = vmatpush1.msra.mxu0 0.0
        %907 = vmatprep.subr.mxu0 0.0
        %908 = vmatpush1.msra.mxu0 0.0
        %909 = vmatprep.subr.mxu0 0.0
        %910 = vmatpush1.msra.mxu0 0.0
        %911 = vmatprep.subr.mxu0 0.0
        %912 = vmatpush1.msra.mxu0 0.0
        %913 = vmatprep.subr.mxu0 0.0
        %914 = vmatpush1.msra.mxu0 0.0
        %915 = vmatprep.mubr.f32.mxu0 0.0
        %916 = vmatmul.mubr.f32.gmra.mrb[0].mxu0 %v843
        %v917 = vpop.f32.mrb[0].mxu0
        %v918 = vadd.f32 0.0, %v917
        %v919 = vpop.f32.mrb[0].mxu0
        %v920 = vadd.f32 0.0, %v919
        %921 = vdwg.mxu0
        %922 = vmatprep.subr.mxu0 0.0
        %923 = vmatpush1.msra.mxu0 %v849
        %924 = vmatprep.subr.mxu0 0.0
        %925 = vmatpush1.msra.mxu0 0.0
        %926 = vmatprep.subr.mxu0 0.0
        %927 = vmatpush1.msra.mxu0 0.0
        %928 = vmatprep.subr.mxu0 0.0
        %929 = vmatpush1.msra.mxu0 0.0
        %930 = vmatprep.subr.mxu0 0.0
        %931 = vmatpush1.msra.mxu0 0.0
        %932 = vmatprep.subr.mxu0 0.0
        %933 = vmatpush1.msra.mxu0 0.0
        %934 = vmatprep.subr.mxu0 0.0
        %935 = vmatpush1.msra.mxu0 0.0
        %936 = vmatprep.subr.mxu0 0.0
        %937 = vmatpush1.msra.mxu0 0.0
        %938 = vmatprep.subr.mxu0 0.0
        %939 = vmatpush1.msra.mxu0 0.0
        %940 = vmatprep.subr.mxu0 0.0
        %941 = vmatpush1.msra.mxu0 0.0
        %942 = vmatprep.subr.mxu0 0.0
        %943 = vmatpush1.msra.mxu0 0.0
        %944 = vmatprep.subr.mxu0 0.0
        %945 = vmatpush1.msra.mxu0 0.0
        %946 = vmatprep.subr.mxu0 0.0
        %947 = vmatpush1.msra.mxu0 0.0
        %948 = vmatprep.subr.mxu0 0.0
        %949 = vmatpush1.msra.mxu0 0.0
        %950 = vmatprep.subr.mxu0 0.0
        %951 = vmatpush1.msra.mxu0 0.0
        %952 = vmatprep.subr.mxu0 0.0
        %953 = vmatpush1.msra.mxu0 0.0
        %954 = vmatprep.subr.mxu0 0.0
        %955 = vmatpush1.msra.mxu0 0.0
        %956 = vmatprep.subr.mxu0 0.0
        %957 = vmatpush1.msra.mxu0 0.0
        %958 = vmatprep.subr.mxu0 0.0
        %959 = vmatpush1.msra.mxu0 0.0
        %960 = vmatprep.subr.mxu0 0.0
        %961 = vmatpush1.msra.mxu0 0.0
        %962 = vmatprep.subr.mxu0 0.0
        %963 = vmatpush1.msra.mxu0 0.0
        %964 = vmatprep.subr.mxu0 0.0
        %965 = vmatpush1.msra.mxu0 0.0
        %966 = vmatprep.subr.mxu0 0.0
        %967 = vmatpush1.msra.mxu0 0.0
        %968 = vmatprep.subr.mxu0 0.0
        %969 = vmatpush1.msra.mxu0 0.0
        %970 = vmatprep.subr.mxu0 0.0
        %971 = vmatpush1.msra.mxu0 0.0
        %972 = vmatprep.subr.mxu0 0.0
        %973 = vmatpush1.msra.mxu0 0.0
        %974 = vmatprep.subr.mxu0 0.0
        %975 = vmatpush1.msra.mxu0 0.0
        %976 = vmatprep.subr.mxu0 0.0
        %977 = vmatpush1.msra.mxu0 0.0
        %978 = vmatprep.subr.mxu0 0.0
        %979 = vmatpush1.msra.mxu0 0.0
        %980 = vmatprep.subr.mxu0 0.0
        %981 = vmatpush1.msra.mxu0 0.0
        %982 = vmatprep.subr.mxu0 0.0
        %983 = vmatpush1.msra.mxu0 0.0
        %984 = vmatprep.subr.mxu0 0.0
        %985 = vmatpush1.msra.mxu0 0.0
        %986 = vmatprep.mubr.f32.mxu0 0.0
        %987 = vmatmul.mubr.f32.gmra.mrb[0].mxu0 %v843
        %v988 = vpop.f32.mrb[0].mxu0
        %v989 = vadd.f32 0.0, %v988
        %v990 = vpop.f32.mrb[0].mxu0
        %991 = vdwg.mxu0
        %v992 = vadd.f32 %v823, %v918
        %v993 = vadd.f32 %v824, %v920
        %v994 = vadd.f32 %v825, %v989
        %s995 = scalar_lea.vmem %s0, 40
        %v996 = vld [vmem:[%s995] sm:$0xff]
        %v997 = vld [vmem:[%s168] sm:$0xff]
        %v998 = vld [vmem:[%s168 + $0x8] sm:$0xf]
        %v1001 = vcombine.high %v997, %v997
        %1002 = vrot.lane.b32.xlu0 %v997, 108
        %v1003 = vpop.permute.xlu0 %1002
        %1004 = vrot.lane.b32.xlu0 %v1001, 108
        %v1005 = vpop.permute.xlu0 %1004
        %1006 = vrot.lane.b32.xlu0 %v998, 108
        %v1007 = vpop.permute.xlu0 %1006
        %vm1008 = vcmask 883712
        %v1009 = vsel %vm1008, %v1003, %v1005
        %v1010 = vsel %vm1008, %v1005, %v1007
        %v1012 = vsel %vm186, %v996, 0
        %v1014 = vsel %vm190, %v1009, 0
        %v1016 = vsel %vm190, %v1010, 0
        %v1018 = vsel %vm190, %v1007, 0
        %1020 = vmatprep.subr.mxu0 %v1016
        %1021 = vmatpush1.msra.mxu0 %v1014
        %1022 = vmatprep.subr.mxu0 0.0
        %1023 = vmatpush1.msra.mxu0 0.0
        %1024 = vmatprep.subr.mxu0 0.0
        %1025 = vmatpush1.msra.mxu0 0.0
        %1026 = vmatprep.subr.mxu0 0.0
        %1027 = vmatpush1.msra.mxu0 0.0
        %1028 = vmatprep.subr.mxu0 0.0
        %1029 = vmatpush1.msra.mxu0 0.0
        %1030 = vmatprep.subr.mxu0 0.0
        %1031 = vmatpush1.msra.mxu0 0.0
        %1032 = vmatprep.subr.mxu0 0.0
        %1033 = vmatpush1.msra.mxu0 0.0
        %1034 = vmatprep.subr.mxu0 0.0
        %1035 = vmatpush1.msra.mxu0 0.0
        %1036 = vmatprep.subr.mxu0 0.0
        %1037 = vmatpush1.msra.mxu0 0.0
        %1038 = vmatprep.subr.mxu0 0.0
        %1039 = vmatpush1.msra.mxu0 0.0
        %1040 = vmatprep.subr.mxu0 0.0
        %1041 = vmatpush1.msra.mxu0 0.0
        %1042 = vmatprep.subr.mxu0 0.0
        %1043 = vmatpush1.msra.mxu0 0.0
        %1044 = vmatprep.subr.mxu0 0.0
        %1045 = vmatpush1.msra.mxu0 0.0
        %1046 = vmatprep.subr.mxu0 0.0
        %1047 = vmatpush1.msra.mxu0 0.0
        %1048 = vmatprep.subr.mxu0 0.0
        %1049 = vmatpush1.msra.mxu0 0.0
        %1050 = vmatprep.subr.mxu0 0.0
        %1051 = vmatpush1.msra.mxu0 0.0
        %1052 = vmatprep.subr.mxu0 0.0
        %1053 = vmatpush1.msra.mxu0 0.0
        %1054 = vmatprep.subr.mxu0 0.0
        %1055 = vmatpush1.msra.mxu0 0.0
        %1056 = vmatprep.subr.mxu0 0.0
        %1057 = vmatpush1.msra.mxu0 0.0
        %1058 = vmatprep.subr.mxu0 0.0
        %1059 = vmatpush1.msra.mxu0 0.0
        %1060 = vmatprep.subr.mxu0 0.0
        %1061 = vmatpush1.msra.mxu0 0.0
        %1062 = vmatprep.subr.mxu0 0.0
        %1063 = vmatpush1.msra.mxu0 0.0
        %1064 = vmatprep.subr.mxu0 0.0
        %1065 = vmatpush1.msra.mxu0 0.0
        %1066 = vmatprep.subr.mxu0 0.0
        %1067 = vmatpush1.msra.mxu0 0.0
        %1068 = vmatprep.subr.mxu0 0.0
        %1069 = vmatpush1.msra.mxu0 0.0
        %1070 = vmatprep.subr.mxu0 0.0
        %1071 = vmatpush1.msra.mxu0 0.0
        %1072 = vmatprep.subr.mxu0 0.0
        %1073 = vmatpush1.msra.mxu0 0.0
        %1074 = vmatprep.subr.mxu0 0.0
        %1075 = vmatpush1.msra.mxu0 0.0
        %1076 = vmatprep.subr.mxu0 0.0
        %1077 = vmatpush1.msra.mxu0 0.0
        %1078 = vmatprep.subr.mxu0 0.0
        %1079 = vmatpush1.msra.mxu0 0.0
        %1080 = vmatprep.subr.mxu0 0.0
        %1081 = vmatpush1.msra.mxu0 0.0
        %1082 = vmatprep.subr.mxu0 0.0
        %1083 = vmatpush1.msra.mxu0 0.0
        %1084 = vmatprep.mubr.f32.mxu0 0.0
        %1085 = vmatmul.mubr.f32.gmra.mrb[0].mxu0 %v1012
        %v1086 = vpop.f32.mrb[0].mxu0
        %v1087 = vadd.f32 0.0, %v1086
        %v1088 = vpop.f32.mrb[0].mxu0
        %v1089 = vadd.f32 0.0, %v1088
        %1090 = vdwg.mxu0
        %1091 = vmatprep.subr.mxu0 0.0
        %1092 = vmatpush1.msra.mxu0 %v1018
        %1093 = vmatprep.subr.mxu0 0.0
        %1094 = vmatpush1.msra.mxu0 0.0
        %1095 = vmatprep.subr.mxu0 0.0
        %1096 = vmatpush1.msra.mxu0 0.0
        %1097 = vmatprep.subr.mxu0 0.0
        %1098 = vmatpush1.msra.mxu0 0.0
        %1099 = vmatprep.subr.mxu0 0.0
        %1100 = vmatpush1.msra.mxu0 0.0
        %1101 = vmatprep.subr.mxu0 0.0
        %1102 = vmatpush1.msra.mxu0 0.0
        %1103 = vmatprep.subr.mxu0 0.0
        %1104 = vmatpush1.msra.mxu0 0.0
        %1105 = vmatprep.subr.mxu0 0.0
        %1106 = vmatpush1.msra.mxu0 0.0
        %1107 = vmatprep.subr.mxu0 0.0
        %1108 = vmatpush1.msra.mxu0 0.0
        %1109 = vmatprep.subr.mxu0 0.0
        %1110 = vmatpush1.msra.mxu0 0.0
        %1111 = vmatprep.subr.mxu0 0.0
        %1112 = vmatpush1.msra.mxu0 0.0
        %1113 = vmatprep.subr.mxu0 0.0
        %1114 = vmatpush1.msra.mxu0 0.0
        %1115 = vmatprep.subr.mxu0 0.0
        %1116 = vmatpush1.msra.mxu0 0.0
        %1117 = vmatprep.subr.mxu0 0.0
        %1118 = vmatpush1.msra.mxu0 0.0
        %1119 = vmatprep.subr.mxu0 0.0
        %1120 = vmatpush1.msra.mxu0 0.0
        %1121 = vmatprep.subr.mxu0 0.0
        %1122 = vmatpush1.msra.mxu0 0.0
        %1123 = vmatprep.subr.mxu0 0.0
        %1124 = vmatpush1.msra.mxu0 0.0
        %1125 = vmatprep.subr.mxu0 0.0
        %1126 = vmatpush1.msra.mxu0 0.0
        %1127 = vmatprep.subr.mxu0 0.0
        %1128 = vmatpush1.msra.mxu0 0.0
        %1129 = vmatprep.subr.mxu0 0.0
        %1130 = vmatpush1.msra.mxu0 0.0
        %1131 = vmatprep.subr.mxu0 0.0
        %1132 = vmatpush1.msra.mxu0 0.0
        %1133 = vmatprep.subr.mxu0 0.0
        %1134 = vmatpush1.msra.mxu0 0.0
        %1135 = vmatprep.subr.mxu0 0.0
        %1136 = vmatpush1.msra.mxu0 0.0
        %1137 = vmatprep.subr.mxu0 0.0
        %1138 = vmatpush1.msra.mxu0 0.0
        %1139 = vmatprep.subr.mxu0 0.0
        %1140 = vmatpush1.msra.mxu0 0.0
        %1141 = vmatprep.subr.mxu0 0.0
        %1142 = vmatpush1.msra.mxu0 0.0
        %1143 = vmatprep.subr.mxu0 0.0
        %1144 = vmatpush1.msra.mxu0 0.0
        %1145 = vmatprep.subr.mxu0 0.0
        %1146 = vmatpush1.msra.mxu0 0.0
        %1147 = vmatprep.subr.mxu0 0.0
        %1148 = vmatpush1.msra.mxu0 0.0
        %1149 = vmatprep.subr.mxu0 0.0
        %1150 = vmatpush1.msra.mxu0 0.0
        %1151 = vmatprep.subr.mxu0 0.0
        %1152 = vmatpush1.msra.mxu0 0.0
        %1153 = vmatprep.subr.mxu0 0.0
        %1154 = vmatpush1.msra.mxu0 0.0
        %1155 = vmatprep.mubr.f32.mxu0 0.0
        %1156 = vmatmul.mubr.f32.gmra.mrb[0].mxu0 %v1012
        %v1157 = vpop.f32.mrb[0].mxu0
        %v1158 = vadd.f32 0.0, %v1157
        %v1159 = vpop.f32.mrb[0].mxu0
        %1160 = vdwg.mxu0
        %v1161 = vadd.f32 %v992, %v1087
        %v1162 = vadd.f32 %v993, %v1089
        %v1163 = vadd.f32 %v994, %v1158
        %s1164 = scalar_lea.vmem %s0, 48
        %v1165 = vld [vmem:[%s1164] sm:$0xff]
        %v1166 = vld [vmem:[%s168] sm:$0xff]
        %v1167 = vld [vmem:[%s168 + $0x8] sm:$0xf]
        %v1170 = vcombine.high %v1166, %v1166
        %1171 = vrot.lane.b32.xlu0 %v1166, 92
        %v1172 = vpop.permute.xlu0 %1171
        %1173 = vrot.lane.b32.xlu0 %v1170, 92
        %v1174 = vpop.permute.xlu0 %1173
        %1175 = vrot.lane.b32.xlu0 %v1167, 92
        %v1176 = vpop.permute.xlu0 %1175
        %vm1177 = vcmask 752640
        %v1178 = vsel %vm1177, %v1172, %v1174
        %v1179 = vsel %vm1177, %v1174, %v1176
        %v1181 = vsel %vm186, %v1165, 0
        %v1183 = vsel %vm190, %v1178, 0
        %v1185 = vsel %vm190, %v1179, 0
        %v1187 = vsel %vm190, %v1176, 0
        %1189 = vmatprep.subr.mxu0 %v1185
        %1190 = vmatpush1.msra.mxu0 %v1183
        %1191 = vmatprep.subr.mxu0 0.0
        %1192 = vmatpush1.msra.mxu0 0.0
        %1193 = vmatprep.subr.mxu0 0.0
        %1194 = vmatpush1.msra.mxu0 0.0
        %1195 = vmatprep.subr.mxu0 0.0
        %1196 = vmatpush1.msra.mxu0 0.0
        %1197 = vmatprep.subr.mxu0 0.0
        %1198 = vmatpush1.msra.mxu0 0.0
        %1199 = vmatprep.subr.mxu0 0.0
        %1200 = vmatpush1.msra.mxu0 0.0
        %1201 = vmatprep.subr.mxu0 0.0
        %1202 = vmatpush1.msra.mxu0 0.0
        %1203 = vmatprep.subr.mxu0 0.0
        %1204 = vmatpush1.msra.mxu0 0.0
        %1205 = vmatprep.subr.mxu0 0.0
        %1206 = vmatpush1.msra.mxu0 0.0
        %1207 = vmatprep.subr.mxu0 0.0
        %1208 = vmatpush1.msra.mxu0 0.0
        %1209 = vmatprep.subr.mxu0 0.0
        %1210 = vmatpush1.msra.mxu0 0.0
        %1211 = vmatprep.subr.mxu0 0.0
        %1212 = vmatpush1.msra.mxu0 0.0
        %1213 = vmatprep.subr.mxu0 0.0
        %1214 = vmatpush1.msra.mxu0 0.0
        %1215 = vmatprep.subr.mxu0 0.0
        %1216 = vmatpush1.msra.mxu0 0.0
        %1217 = vmatprep.subr.mxu0 0.0
        %1218 = vmatpush1.msra.mxu0 0.0
        %1219 = vmatprep.subr.mxu0 0.0
        %1220 = vmatpush1.msra.mxu0 0.0
        %1221 = vmatprep.subr.mxu0 0.0
        %1222 = vmatpush1.msra.mxu0 0.0
        %1223 = vmatprep.subr.mxu0 0.0
        %1224 = vmatpush1.msra.mxu0 0.0
        %1225 = vmatprep.subr.mxu0 0.0
        %1226 = vmatpush1.msra.mxu0 0.0
        %1227 = vmatprep.subr.mxu0 0.0
        %1228 = vmatpush1.msra.mxu0 0.0
        %1229 = vmatprep.subr.mxu0 0.0
        %1230 = vmatpush1.msra.mxu0 0.0
        %1231 = vmatprep.subr.mxu0 0.0
        %1232 = vmatpush1.msra.mxu0 0.0
        %1233 = vmatprep.subr.mxu0 0.0
        %1234 = vmatpush1.msra.mxu0 0.0
        %1235 = vmatprep.subr.mxu0 0.0
        %1236 = vmatpush1.msra.mxu0 0.0
        %1237 = vmatprep.subr.mxu0 0.0
        %1238 = vmatpush1.msra.mxu0 0.0
        %1239 = vmatprep.subr.mxu0 0.0
        %1240 = vmatpush1.msra.mxu0 0.0
        %1241 = vmatprep.subr.mxu0 0.0
        %1242 = vmatpush1.msra.mxu0 0.0
        %1243 = vmatprep.subr.mxu0 0.0
        %1244 = vmatpush1.msra.mxu0 0.0
        %1245 = vmatprep.subr.mxu0 0.0
        %1246 = vmatpush1.msra.mxu0 0.0
        %1247 = vmatprep.subr.mxu0 0.0
        %1248 = vmatpush1.msra.mxu0 0.0
        %1249 = vmatprep.subr.mxu0 0.0
        %1250 = vmatpush1.msra.mxu0 0.0
        %1251 = vmatprep.subr.mxu0 0.0
        %1252 = vmatpush1.msra.mxu0 0.0
        %1253 = vmatprep.mubr.f32.mxu0 0.0
        %1254 = vmatmul.mubr.f32.gmra.mrb[0].mxu0 %v1181
        %v1255 = vpop.f32.mrb[0].mxu0
        %v1256 = vadd.f32 0.0, %v1255
        %v1257 = vpop.f32.mrb[0].mxu0
        %v1258 = vadd.f32 0.0, %v1257
        %1259 = vdwg.mxu0
        %1260 = vmatprep.subr.mxu0 0.0
        %1261 = vmatpush1.msra.mxu0 %v1187
        %1262 = vmatprep.subr.mxu0 0.0
        %1263 = vmatpush1.msra.mxu0 0.0
        %1264 = vmatprep.subr.mxu0 0.0
        %1265 = vmatpush1.msra.mxu0 0.0
        %1266 = vmatprep.subr.mxu0 0.0
        %1267 = vmatpush1.msra.mxu0 0.0
        %1268 = vmatprep.subr.mxu0 0.0
        %1269 = vmatpush1.msra.mxu0 0.0
        %1270 = vmatprep.subr.mxu0 0.0
        %1271 = vmatpush1.msra.mxu0 0.0
        %1272 = vmatprep.subr.mxu0 0.0
        %1273 = vmatpush1.msra.mxu0 0.0
        %1274 = vmatprep.subr.mxu0 0.0
        %1275 = vmatpush1.msra.mxu0 0.0
        %1276 = vmatprep.subr.mxu0 0.0
        %1277 = vmatpush1.msra.mxu0 0.0
        %1278 = vmatprep.subr.mxu0 0.0
        %1279 = vmatpush1.msra.mxu0 0.0
        %1280 = vmatprep.subr.mxu0 0.0
        %1281 = vmatpush1.msra.mxu0 0.0
        %1282 = vmatprep.subr.mxu0 0.0
        %1283 = vmatpush1.msra.mxu0 0.0
        %1284 = vmatprep.subr.mxu0 0.0
        %1285 = vmatpush1.msra.mxu0 0.0
        %1286 = vmatprep.subr.mxu0 0.0
        %1287 = vmatpush1.msra.mxu0 0.0
        %1288 = vmatprep.subr.mxu0 0.0
        %1289 = vmatpush1.msra.mxu0 0.0
        %1290 = vmatprep.subr.mxu0 0.0
        %1291 = vmatpush1.msra.mxu0 0.0
        %1292 = vmatprep.subr.mxu0 0.0
        %1293 = vmatpush1.msra.mxu0 0.0
        %1294 = vmatprep.subr.mxu0 0.0
        %1295 = vmatpush1.msra.mxu0 0.0
        %1296 = vmatprep.subr.mxu0 0.0
        %1297 = vmatpush1.msra.mxu0 0.0
        %1298 = vmatprep.subr.mxu0 0.0
        %1299 = vmatpush1.msra.mxu0 0.0
        %1300 = vmatprep.subr.mxu0 0.0
        %1301 = vmatpush1.msra.mxu0 0.0
        %1302 = vmatprep.subr.mxu0 0.0
        %1303 = vmatpush1.msra.mxu0 0.0
        %1304 = vmatprep.subr.mxu0 0.0
        %1305 = vmatpush1.msra.mxu0 0.0
        %1306 = vmatprep.subr.mxu0 0.0
        %1307 = vmatpush1.msra.mxu0 0.0
        %1308 = vmatprep.subr.mxu0 0.0
        %1309 = vmatpush1.msra.mxu0 0.0
        %1310 = vmatprep.subr.mxu0 0.0
        %1311 = vmatpush1.msra.mxu0 0.0
        %1312 = vmatprep.subr.mxu0 0.0
        %1313 = vmatpush1.msra.mxu0 0.0
        %1314 = vmatprep.subr.mxu0 0.0
        %1315 = vmatpush1.msra.mxu0 0.0
        %1316 = vmatprep.subr.mxu0 0.0
        %1317 = vmatpush1.msra.mxu0 0.0
        %1318 = vmatprep.subr.mxu0 0.0
        %1319 = vmatpush1.msra.mxu0 0.0
        %1320 = vmatprep.subr.mxu0 0.0
        %1321 = vmatpush1.msra.mxu0 0.0
        %1322 = vmatprep.subr.mxu0 0.0
        %1323 = vmatpush1.msra.mxu0 0.0
        %1324 = vmatprep.mubr.f32.mxu0 0.0
        %1325 = vmatmul.mubr.f32.gmra.mrb[0].mxu0 %v1181
        %v1326 = vpop.f32.mrb[0].mxu0
        %v1327 = vadd.f32 0.0, %v1326
        %v1328 = vpop.f32.mrb[0].mxu0
        %1329 = vdwg.mxu0
        %v1330 = vadd.f32 %v1161, %v1256
        %v1331 = vadd.f32 %v1162, %v1258
        %v1332 = vadd.f32 %v1163, %v1327
        %s1333 = scalar_lea.vmem %s0, 56
        %v1334 = vld [vmem:[%s1333] sm:$0xff]
        %v1335 = vld [vmem:[%s168] sm:$0xff]
        %v1336 = vld [vmem:[%s168 + $0x8] sm:$0xf]
        %v1339 = vcombine.high %v1335, %v1335
        %1340 = vrot.lane.b32.xlu0 %v1335, 91
        %v1341 = vpop.permute.xlu0 %1340
        %1342 = vrot.lane.b32.xlu0 %v1339, 91
        %v1343 = vpop.permute.xlu0 %1342
        %1344 = vrot.lane.b32.xlu0 %v1336, 91
        %v1345 = vpop.permute.xlu0 %1344
        %vm1346 = vcmask 744448
        %v1347 = vsel %vm1346, %v1341, %v1343
        %v1348 = vsel %vm1346, %v1343, %v1345
        %v1350 = vsel %vm186, %v1334, 0
        %v1352 = vsel %vm190, %v1347, 0
        %v1354 = vsel %vm190, %v1348, 0
        %v1356 = vsel %vm190, %v1345, 0
        %1358 = vmatprep.subr.mxu0 %v1354
        %1359 = vmatpush1.msra.mxu0 %v1352
        %1360 = vmatprep.subr.mxu0 0.0
        %1361 = vmatpush1.msra.mxu0 0.0
        %1362 = vmatprep.subr.mxu0 0.0
        %1363 = vmatpush1.msra.mxu0 0.0
        %1364 = vmatprep.subr.mxu0 0.0
        %1365 = vmatpush1.msra.mxu0 0.0
        %1366 = vmatprep.subr.mxu0 0.0
        %1367 = vmatpush1.msra.mxu0 0.0
        %1368 = vmatprep.subr.mxu0 0.0
        %1369 = vmatpush1.msra.mxu0 0.0
        %1370 = vmatprep.subr.mxu0 0.0
        %1371 = vmatpush1.msra.mxu0 0.0
        %1372 = vmatprep.subr.mxu0 0.0
        %1373 = vmatpush1.msra.mxu0 0.0
        %1374 = vmatprep.subr.mxu0 0.0
        %1375 = vmatpush1.msra.mxu0 0.0
        %1376 = vmatprep.subr.mxu0 0.0
        %1377 = vmatpush1.msra.mxu0 0.0
        %1378 = vmatprep.subr.mxu0 0.0
        %1379 = vmatpush1.msra.mxu0 0.0
        %1380 = vmatprep.subr.mxu0 0.0
        %1381 = vmatpush1.msra.mxu0 0.0
        %1382 = vmatprep.subr.mxu0 0.0
        %1383 = vmatpush1.msra.mxu0 0.0
        %1384 = vmatprep.subr.mxu0 0.0
        %1385 = vmatpush1.msra.mxu0 0.0
        %1386 = vmatprep.subr.mxu0 0.0
        %1387 = vmatpush1.msra.mxu0 0.0
        %1388 = vmatprep.subr.mxu0 0.0
        %1389 = vmatpush1.msra.mxu0 0.0
        %1390 = vmatprep.subr.mxu0 0.0
        %1391 = vmatpush1.msra.mxu0 0.0
        %1392 = vmatprep.subr.mxu0 0.0
        %1393 = vmatpush1.msra.mxu0 0.0
        %1394 = vmatprep.subr.mxu0 0.0
        %1395 = vmatpush1.msra.mxu0 0.0
        %1396 = vmatprep.subr.mxu0 0.0
        %1397 = vmatpush1.msra.mxu0 0.0
        %1398 = vmatprep.subr.mxu0 0.0
        %1399 = vmatpush1.msra.mxu0 0.0
        %1400 = vmatprep.subr.mxu0 0.0
        %1401 = vmatpush1.msra.mxu0 0.0
        %1402 = vmatprep.subr.mxu0 0.0
        %1403 = vmatpush1.msra.mxu0 0.0
        %1404 = vmatprep.subr.mxu0 0.0
        %1405 = vmatpush1.msra.mxu0 0.0
        %1406 = vmatprep.subr.mxu0 0.0
        %1407 = vmatpush1.msra.mxu0 0.0
        %1408 = vmatprep.subr.mxu0 0.0
        %1409 = vmatpush1.msra.mxu0 0.0
        %1410 = vmatprep.subr.mxu0 0.0
        %1411 = vmatpush1.msra.mxu0 0.0
        %1412 = vmatprep.subr.mxu0 0.0
        %1413 = vmatpush1.msra.mxu0 0.0
        %1414 = vmatprep.subr.mxu0 0.0
        %1415 = vmatpush1.msra.mxu0 0.0
        %1416 = vmatprep.subr.mxu0 0.0
        %1417 = vmatpush1.msra.mxu0 0.0
        %1418 = vmatprep.subr.mxu0 0.0
        %1419 = vmatpush1.msra.mxu0 0.0
        %1420 = vmatprep.subr.mxu0 0.0
        %1421 = vmatpush1.msra.mxu0 0.0
        %1422 = vmatprep.mubr.f32.mxu0 0.0
        %1423 = vmatmul.mubr.f32.gmra.mrb[0].mxu0 %v1350
        %v1424 = vpop.f32.mrb[0].mxu0
        %v1425 = vadd.f32 0.0, %v1424
        %v1426 = vpop.f32.mrb[0].mxu0
        %v1427 = vadd.f32 0.0, %v1426
        %1428 = vdwg.mxu0
        %1429 = vmatprep.subr.mxu0 0.0
        %1430 = vmatpush1.msra.mxu0 %v1356
        %1431 = vmatprep.subr.mxu0 0.0
        %1432 = vmatpush1.msra.mxu0 0.0
        %1433 = vmatprep.subr.mxu0 0.0
        %1434 = vmatpush1.msra.mxu0 0.0
        %1435 = vmatprep.subr.mxu0 0.0
        %1436 = vmatpush1.msra.mxu0 0.0
        %1437 = vmatprep.subr.mxu0 0.0
        %1438 = vmatpush1.msra.mxu0 0.0
        %1439 = vmatprep.subr.mxu0 0.0
        %1440 = vmatpush1.msra.mxu0 0.0
        %1441 = vmatprep.subr.mxu0 0.0
        %1442 = vmatpush1.msra.mxu0 0.0
        %1443 = vmatprep.subr.mxu0 0.0
        %1444 = vmatpush1.msra.mxu0 0.0
        %1445 = vmatprep.subr.mxu0 0.0
        %1446 = vmatpush1.msra.mxu0 0.0
        %1447 = vmatprep.subr.mxu0 0.0
        %1448 = vmatpush1.msra.mxu0 0.0
        %1449 = vmatprep.subr.mxu0 0.0
        %1450 = vmatpush1.msra.mxu0 0.0
        %1451 = vmatprep.subr.mxu0 0.0
        %1452 = vmatpush1.msra.mxu0 0.0
        %1453 = vmatprep.subr.mxu0 0.0
        %1454 = vmatpush1.msra.mxu0 0.0
        %1455 = vmatprep.subr.mxu0 0.0
        %1456 = vmatpush1.msra.mxu0 0.0
        %1457 = vmatprep.subr.mxu0 0.0
        %1458 = vmatpush1.msra.mxu0 0.0
        %1459 = vmatprep.subr.mxu0 0.0
        %1460 = vmatpush1.msra.mxu0 0.0
        %1461 = vmatprep.subr.mxu0 0.0
        %1462 = vmatpush1.msra.mxu0 0.0
        %1463 = vmatprep.subr.mxu0 0.0
        %1464 = vmatpush1.msra.mxu0 0.0
        %1465 = vmatprep.subr.mxu0 0.0
        %1466 = vmatpush1.msra.mxu0 0.0
        %1467 = vmatprep.subr.mxu0 0.0
        %1468 = vmatpush1.msra.mxu0 0.0
        %1469 = vmatprep.subr.mxu0 0.0
        %1470 = vmatpush1.msra.mxu0 0.0
        %1471 = vmatprep.subr.mxu0 0.0
        %1472 = vmatpush1.msra.mxu0 0.0
        %1473 = vmatprep.subr.mxu0 0.0
        %1474 = vmatpush1.msra.mxu0 0.0
        %1475 = vmatprep.subr.mxu0 0.0
        %1476 = vmatpush1.msra.mxu0 0.0
        %1477 = vmatprep.subr.mxu0 0.0
        %1478 = vmatpush1.msra.mxu0 0.0
        %1479 = vmatprep.subr.mxu0 0.0
        %1480 = vmatpush1.msra.mxu0 0.0
        %1481 = vmatprep.subr.mxu0 0.0
        %1482 = vmatpush1.msra.mxu0 0.0
        %1483 = vmatprep.subr.mxu0 0.0
        %1484 = vmatpush1.msra.mxu0 0.0
        %1485 = vmatprep.subr.mxu0 0.0
        %1486 = vmatpush1.msra.mxu0 0.0
        %1487 = vmatprep.subr.mxu0 0.0
        %1488 = vmatpush1.msra.mxu0 0.0
        %1489 = vmatprep.subr.mxu0 0.0
        %1490 = vmatpush1.msra.mxu0 0.0
        %1491 = vmatprep.subr.mxu0 0.0
        %1492 = vmatpush1.msra.mxu0 0.0
        %1493 = vmatprep.mubr.f32.mxu0 0.0
        %1494 = vmatmul.mubr.f32.gmra.mrb[0].mxu0 %v1350
        %v1495 = vpop.f32.mrb[0].mxu0
        %v1496 = vadd.f32 0.0, %v1495
        %v1497 = vpop.f32.mrb[0].mxu0
        %1498 = vdwg.mxu0
        %v1499 = vadd.f32 %v1330, %v1425
        %v1500 = vadd.f32 %v1331, %v1427
        %v1501 = vadd.f32 %v1332, %v1496
        %s1502 = scalar_lea.vmem %s0, 64
        %v1503 = vld [vmem:[%s1502] sm:$0xff]
        %v1504 = vld [vmem:[%s168] sm:$0xff]
        %v1505 = vld [vmem:[%s168 + $0x8] sm:$0xf]
        %v1508 = vcombine.high %v1504, %v1504
        %1509 = vrot.lane.b32.xlu0 %v1504, 90
        %v1510 = vpop.permute.xlu0 %1509
        %1511 = vrot.lane.b32.xlu0 %v1508, 90
        %v1512 = vpop.permute.xlu0 %1511
        %1513 = vrot.lane.b32.xlu0 %v1505, 90
        %v1514 = vpop.permute.xlu0 %1513
        %vm1515 = vcmask 736256
        %v1516 = vsel %vm1515, %v1510, %v1512
        %v1517 = vsel %vm1515, %v1512, %v1514
        %v1519 = vsel %vm186, %v1503, 0
        %v1521 = vsel %vm190, %v1516, 0
        %v1523 = vsel %vm190, %v1517, 0
        %v1525 = vsel %vm190, %v1514, 0
        %1527 = vmatprep.subr.mxu0 %v1523
        %1528 = vmatpush1.msra.mxu0 %v1521
        %1529 = vmatprep.subr.mxu0 0.0
        %1530 = vmatpush1.msra.mxu0 0.0
        %1531 = vmatprep.subr.mxu0 0.0
        %1532 = vmatpush1.msra.mxu0 0.0
        %1533 = vmatprep.subr.mxu0 0.0
        %1534 = vmatpush1.msra.mxu0 0.0
        %1535 = vmatprep.subr.mxu0 0.0
        %1536 = vmatpush1.msra.mxu0 0.0
        %1537 = vmatprep.subr.mxu0 0.0
        %1538 = vmatpush1.msra.mxu0 0.0
        %1539 = vmatprep.subr.mxu0 0.0
        %1540 = vmatpush1.msra.mxu0 0.0
        %1541 = vmatprep.subr.mxu0 0.0
        %1542 = vmatpush1.msra.mxu0 0.0
        %1543 = vmatprep.subr.mxu0 0.0
        %1544 = vmatpush1.msra.mxu0 0.0
        %1545 = vmatprep.subr.mxu0 0.0
        %1546 = vmatpush1.msra.mxu0 0.0
        %1547 = vmatprep.subr.mxu0 0.0
        %1548 = vmatpush1.msra.mxu0 0.0
        %1549 = vmatprep.subr.mxu0 0.0
        %1550 = vmatpush1.msra.mxu0 0.0
        %1551 = vmatprep.subr.mxu0 0.0
        %1552 = vmatpush1.msra.mxu0 0.0
        %1553 = vmatprep.subr.mxu0 0.0
        %1554 = vmatpush1.msra.mxu0 0.0
        %1555 = vmatprep.subr.mxu0 0.0
        %1556 = vmatpush1.msra.mxu0 0.0
        %1557 = vmatprep.subr.mxu0 0.0
        %1558 = vmatpush1.msra.mxu0 0.0
        %1559 = vmatprep.subr.mxu0 0.0
        %1560 = vmatpush1.msra.mxu0 0.0
        %1561 = vmatprep.subr.mxu0 0.0
        %1562 = vmatpush1.msra.mxu0 0.0
        %1563 = vmatprep.subr.mxu0 0.0
        %1564 = vmatpush1.msra.mxu0 0.0
        %1565 = vmatprep.subr.mxu0 0.0
        %1566 = vmatpush1.msra.mxu0 0.0
        %1567 = vmatprep.subr.mxu0 0.0
        %1568 = vmatpush1.msra.mxu0 0.0
        %1569 = vmatprep.subr.mxu0 0.0
        %1570 = vmatpush1.msra.mxu0 0.0
        %1571 = vmatprep.subr.mxu0 0.0
        %1572 = vmatpush1.msra.mxu0 0.0
        %1573 = vmatprep.subr.mxu0 0.0
        %1574 = vmatpush1.msra.mxu0 0.0
        %1575 = vmatprep.subr.mxu0 0.0
        %1576 = vmatpush1.msra.mxu0 0.0
        %1577 = vmatprep.subr.mxu0 0.0
        %1578 = vmatpush1.msra.mxu0 0.0
        %1579 = vmatprep.subr.mxu0 0.0
        %1580 = vmatpush1.msra.mxu0 0.0
        %1581 = vmatprep.subr.mxu0 0.0
        %1582 = vmatpush1.msra.mxu0 0.0
        %1583 = vmatprep.subr.mxu0 0.0
        %1584 = vmatpush1.msra.mxu0 0.0
        %1585 = vmatprep.subr.mxu0 0.0
        %1586 = vmatpush1.msra.mxu0 0.0
        %1587 = vmatprep.subr.mxu0 0.0
        %1588 = vmatpush1.msra.mxu0 0.0
        %1589 = vmatprep.subr.mxu0 0.0
        %1590 = vmatpush1.msra.mxu0 0.0
        %1591 = vmatprep.mubr.f32.mxu0 0.0
        %1592 = vmatmul.mubr.f32.gmra.mrb[0].mxu0 %v1519
        %v1593 = vpop.f32.mrb[0].mxu0
        %v1594 = vadd.f32 0.0, %v1593
        %v1595 = vpop.f32.mrb[0].mxu0
        %v1596 = vadd.f32 0.0, %v1595
        %1597 = vdwg.mxu0
        %1598 = vmatprep.subr.mxu0 0.0
        %1599 = vmatpush1.msra.mxu0 %v1525
        %1600 = vmatprep.subr.mxu0 0.0
        %1601 = vmatpush1.msra.mxu0 0.0
        %1602 = vmatprep.subr.mxu0 0.0
        %1603 = vmatpush1.msra.mxu0 0.0
        %1604 = vmatprep.subr.mxu0 0.0
        %1605 = vmatpush1.msra.mxu0 0.0
        %1606 = vmatprep.subr.mxu0 0.0
        %1607 = vmatpush1.msra.mxu0 0.0
        %1608 = vmatprep.subr.mxu0 0.0
        %1609 = vmatpush1.msra.mxu0 0.0
        %1610 = vmatprep.subr.mxu0 0.0
        %1611 = vmatpush1.msra.mxu0 0.0
        %1612 = vmatprep.subr.mxu0 0.0
        %1613 = vmatpush1.msra.mxu0 0.0
        %1614 = vmatprep.subr.mxu0 0.0
        %1615 = vmatpush1.msra.mxu0 0.0
        %1616 = vmatprep.subr.mxu0 0.0
        %1617 = vmatpush1.msra.mxu0 0.0
        %1618 = vmatprep.subr.mxu0 0.0
        %1619 = vmatpush1.msra.mxu0 0.0
        %1620 = vmatprep.subr.mxu0 0.0
        %1621 = vmatpush1.msra.mxu0 0.0
        %1622 = vmatprep.subr.mxu0 0.0
        %1623 = vmatpush1.msra.mxu0 0.0
        %1624 = vmatprep.subr.mxu0 0.0
        %1625 = vmatpush1.msra.mxu0 0.0
        %1626 = vmatprep.subr.mxu0 0.0
        %1627 = vmatpush1.msra.mxu0 0.0
        %1628 = vmatprep.subr.mxu0 0.0
        %1629 = vmatpush1.msra.mxu0 0.0
        %1630 = vmatprep.subr.mxu0 0.0
        %1631 = vmatpush1.msra.mxu0 0.0
        %1632 = vmatprep.subr.mxu0 0.0
        %1633 = vmatpush1.msra.mxu0 0.0
        %1634 = vmatprep.subr.mxu0 0.0
        %1635 = vmatpush1.msra.mxu0 0.0
        %1636 = vmatprep.subr.mxu0 0.0
        %1637 = vmatpush1.msra.mxu0 0.0
        %1638 = vmatprep.subr.mxu0 0.0
        %1639 = vmatpush1.msra.mxu0 0.0
        %1640 = vmatprep.subr.mxu0 0.0
        %1641 = vmatpush1.msra.mxu0 0.0
        %1642 = vmatprep.subr.mxu0 0.0
        %1643 = vmatpush1.msra.mxu0 0.0
        %1644 = vmatprep.subr.mxu0 0.0
        %1645 = vmatpush1.msra.mxu0 0.0
        %1646 = vmatprep.subr.mxu0 0.0
        %1647 = vmatpush1.msra.mxu0 0.0
        %1648 = vmatprep.subr.mxu0 0.0
        %1649 = vmatpush1.msra.mxu0 0.0
        %1650 = vmatprep.subr.mxu0 0.0
        %1651 = vmatpush1.msra.mxu0 0.0
        %1652 = vmatprep.subr.mxu0 0.0
        %1653 = vmatpush1.msra.mxu0 0.0
        %1654 = vmatprep.subr.mxu0 0.0
        %1655 = vmatpush1.msra.mxu0 0.0
        %1656 = vmatprep.subr.mxu0 0.0
        %1657 = vmatpush1.msra.mxu0 0.0
        %1658 = vmatprep.subr.mxu0 0.0
        %1659 = vmatpush1.msra.mxu0 0.0
        %1660 = vmatprep.subr.mxu0 0.0
        %1661 = vmatpush1.msra.mxu0 0.0
        %1662 = vmatprep.mubr.f32.mxu0 0.0
        %1663 = vmatmul.mubr.f32.gmra.mrb[0].mxu0 %v1519
        %v1664 = vpop.f32.mrb[0].mxu0
        %v1665 = vadd.f32 0.0, %v1664
        %v1666 = vpop.f32.mrb[0].mxu0
        %1667 = vdwg.mxu0
        %v1668 = vadd.f32 %v1499, %v1594
        %v1669 = vadd.f32 %v1500, %v1596
        %v1670 = vadd.f32 %v1501, %v1665
        %v1671 = vld [vmem:[%s1] sm:$0xff]
        %1673 = vset.pattern.permute.xlu0 0
        %1674 = vperm.xlu0 %1673, %v1671
        %v1675 = vpop.permute.xlu0 %1674
        %v1677 = vadd.f32 %v1668, %v1675
        %v1678 = vadd.f32 %v1669, %v1675
        %v1679 = vadd.f32 %v1670, %v1675
        %1680 = vst [vmem:[%s163] sm:$0xff] %v1677
        %1681 = vst [vmem:[%s163 + $0x8] sm:$0xff] %v1678
        %vm1682 = vcmask 261120
        %1683 = vst.msk [vmem:[%s163 + $0x10] sm:$0xff] %vm1682, %v1679
        %s1684 = sand.u32 %s93, 1
        %s1685 = scalar_lea.sflag [#allocation3], %s1684
        %s1686 = sand.u32 %s93, 1
        %s1687 = smul.addr %s1686, 24
        %s1688 = scalar_lea.vmem [#allocation2], %s1687
        // Predicated region
        $region33: #{tpu_custom_call.1} parent=31 // pred_check
          %p1689 = pneg %p103
        $region34: #{tpu_custom_call.1} parent=31 // pred_check_branch
          %1691 = sbr.rel (%p1689) target = $region36
        $region35: #{tpu_custom_call.1} parent=31 // pred_region
          %s1693 = ssub.s32 384, 384
          %1694 = vsyncadd %s1685, %s1693
          %s1695 = smul.addr %s17, 3
          %s1696 = smul.addr %s1695, 128
          %s1697 = scalar_lea.hbm %s3, %s1696
          %s1699 = sshll.u32 %s1688, 4
          %s1700 = int_to_ptr.vmem [resolvable:$true] %s1699
          %1702 = dma.vmem_to_hbm [thread:$0]  %s1700, 384, %s1697, %s1685
        $region36: #{tpu_custom_call.1} parent=31 // pred_fallthru
          _
      $region32: #{tpu_custom_call.1} parent=5 // pred_fallthru
        _
      %p1703 = scmp.le.s32.totalorder 2, %s12
      // Predicated region
      $region37: #{tpu_custom_call.1} parent=5 // pred_check
        %p1704 = pneg %p1703
      $region38: #{tpu_custom_call.1} parent=5 // pred_check_branch
        %1706 = sbr.rel (%p1704) target = $region40
      $region39: #{tpu_custom_call.1} parent=5 // pred_region
        %s1707 = ssub.s32 %s12, 2
        // Predicated region
        $region41: #{tpu_custom_call.1} parent=39 // pred_check
          %p1708 = pneg %p109
        $region42: #{tpu_custom_call.1} parent=39 // pred_check_branch
          %1710 = sbr.rel (%p1708) target = $region44
        $region43: #{tpu_custom_call.1} parent=39 // pred_region
          %s1711 = sand.u32 %s94, 1
          %s1712 = scalar_lea.sflag [#allocation3], %s1711
          %s1713 = sand.u32 %s94, 1
          %s1714 = smul.addr %s1713, 24
          %s1715 = scalar_lea.vmem [#allocation2], %s1714
          %1716 = dma.done %s1712, 384
        $region44: #{tpu_custom_call.1} parent=39 // pred_fallthru
          _
      $region40: #{tpu_custom_call.1} parent=5 // pred_fallthru
        _
    $region6: #{tpu_custom_call.1} parent=1 // loop_footer
      %s16 = sadd.s32 1, %s12
    $region7: #{tpu_custom_call.1} parent=1 // loop_footer_branch
      %11 = sbr.rel target = $region3
    $region8: #{tpu_custom_call.1} parent=1 // loop_exit
      _
    %1717 = vsyncpa [#allocation3], 1
    %s1718 = scalar_lea.sflag [#allocation3], 1
    %1719 = vsyncpa %s1718, 1

</llo_original>
